<compile_context>
chip_gen: v6e
topology: v6e:2x2x1
jax: 0.10.0
libtpu: 0.0.40
codegen_flags: <defaults>
</compile_context>

<pallas_src>
import jax
import jax.numpy as jnp
from jax import lax
from jax.experimental import pallas as pl
from jax.experimental.pallas import tpu as pltpu


def eopa_kernel(feat_ref, mb_ref, w_i_ref, w_h_ref, b_i_ref, b_hn_ref,
                w_out_ref, out_ref, gi_ref):
    TN, Dp = feat_ref.shape          # row tile, lane-padded feature dim
    KTN = mb_ref.shape[1]            # K * TN  (mailbox rows, time-major)
    K = KTN // TN

    # --- Hoisted, batched input-gate matmul --------------------------------
    # mailbox rows [t*TN, (t+1)*TN) are GRU step t for the TN nodes of this
    # tile.  One tall (K*TN, Dp) x (Dp, 3Dp) MXU pass replaces 3*K narrow
    # matmuls; the f32 result is parked in VMEM scratch (controlled spill).
    gi_ref[...] = (jnp.dot(mb_ref[0], w_i_ref[...],
                           preferred_element_type=jnp.float32)
                   + b_i_ref[...])                               # (K*TN, 3Dp)

    w_h = w_h_ref[...]                                           # (Dp, 3Dp) bf16
    b_hn = b_hn_ref[...]                                         # (1, Dp)  f32

    # --- GRU recurrence over the K mailbox messages (h0 = 0) ----------------
    # Only gh = h @ W_h* and the gate math stay on the serial chain.
    # TODO(synk): for K >> 8 switch to lax.fori_loop(..., unroll=True) to
    # bound vreg live ranges.
    h = jnp.zeros((TN, Dp), jnp.float32)
    for t in range(K):
        gi_t = gi_ref[pl.ds(t * TN, TN), :]                      # (TN, 3Dp)
        gh = jnp.dot(h.astype(jnp.bfloat16), w_h,
                     preferred_element_type=jnp.float32)         # (TN, 3Dp)
        # sigmoid(x) = 0.5*(1 + tanh(0.5*x)) -> one EUP op per gate.
        r = 0.5 * (jnp.tanh(0.5 * (gi_t[:, :Dp] + gh[:, :Dp])) + 1.0)
        z = 0.5 * (jnp.tanh(0.5 * (gi_t[:, Dp:2 * Dp] + gh[:, Dp:2 * Dp])) + 1.0)
        n = jnp.tanh(gi_t[:, 2 * Dp:] + r * (gh[:, 2 * Dp:] + b_hn))
        h = (1.0 - z) * n + z * h

    # --- Fused fc_self + fc_neigh: one (TN, 2Dp) x (2Dp, Op) matmul ---------
    lhs = jnp.concatenate([feat_ref[...], h.astype(jnp.bfloat16)], axis=1)
    out_ref[...] = jnp.dot(lhs, w_out_ref[...],
                           preferred_element_type=jnp.float32).astype(out_ref.dtype)


def _round_up(x, m):
    return (x + m - 1) // m * m


def eopa_forward(feat, nbr_idx, params, tile_n=256):
    """feat: (N, D) float32; nbr_idx: (N, K) int32 in-neighbor ids per node."""
    N, D = feat.shape
    K = nbr_idx.shape[1]
    O = params["w_self"].shape[0]

    Dp = _round_up(D, 128)                      # lane-pad feature dim
    Op = _round_up(O, 128)                      # lane-pad output dim
    # Row tile: multiple of 16 (bf16 sublane packing); aim for >= 2 grid steps
    # so dimension_semantics=("parallel",) can use both v7x TensorCores.
    TN = min(tile_n, _round_up(max((N + 1) // 2, 1), 16))
    Np = _round_up(N, TN)
    n_tiles = Np // TN

    f32 = feat.astype(jnp.float32)

    # --- BatchNorm1d batch statistics (XLA pre-pass); Dropout(p=0) = identity ---
    mean = jnp.mean(f32, axis=0)
    var = jnp.mean((f32 - mean) ** 2, axis=0)
    scale = params["bn_gamma"] * lax.rsqrt(var + 1e-5)
    fbn = (f32 - mean) * scale + params["bn_beta"]
    fbn16 = fbn.astype(jnp.bfloat16)            # bf16 halves feat + mailbox HBM traffic

    # --- Neighbor gather straight into (row-tile, time)-major layout -----------
    # mb[i, t*TN + p, :] = fbn16[nbr_idx[i*TN + p, t], :]   (no big transpose pass)
    nbr_pad = jnp.pad(nbr_idx, ((0, Np - N), (0, 0)))       # padded rows gather node 0
    idx = nbr_pad.reshape(n_tiles, TN, K).transpose(0, 2, 1).reshape(n_tiles, K * TN)
    mb = fbn16[idx]                                         # (n_tiles, K*TN, D) bf16

    feat_p = jnp.pad(fbn16, ((0, Np - N), (0, Dp - D)))
    mb_p = jnp.pad(mb, ((0, 0), (0, 0), (0, Dp - D)))

    # --- GRU weights: fuse the 3 gates into one wide (Dp, 3Dp) RHS per side ----
    w_ih, w_hh = params["w_ih"], params["w_hh"]
    b_ih, b_hh = params["b_ih"], params["b_hh"]

    def gate_block(w, g):                       # gate rows of (3D, D) -> padded (Dp, Dp)
        return jnp.pad(w[g * D:(g + 1) * D, :].T, ((0, Dp - D), (0, Dp - D)))

    w_i = jnp.concatenate([gate_block(w_ih, g) for g in range(3)],
                          axis=1).astype(jnp.bfloat16)      # (Dp, 3Dp)
    w_h = jnp.concatenate([gate_block(w_hh, g) for g in range(3)],
                          axis=1).astype(jnp.bfloat16)      # (Dp, 3Dp)

    def pad_vec(b):                             # zero-padded lanes keep padded h == 0
        return jnp.pad(b, (0, Dp - D)).astype(jnp.float32)

    b_i = jnp.concatenate([pad_vec(b_ih[:D] + b_hh[:D]),             # r: fold ih+hh
                           pad_vec(b_ih[D:2 * D] + b_hh[D:2 * D]),   # z: fold ih+hh
                           pad_vec(b_ih[2 * D:])])[None, :]          # n: ih only
    b_hn = pad_vec(b_hh[2 * D:])[None, :]                            # n: hh (scaled by r)

    # --- fc_self + fc_neigh fused into one (2Dp, Op) RHS -----------------------
    w_out = jnp.concatenate(
        [jnp.pad(params["w_self"].T, ((0, Dp - D), (0, Op - O))),
         jnp.pad(params["w_neigh"].T, ((0, Dp - D), (0, Op - O)))],
        axis=0).astype(jnp.bfloat16)                                 # (2Dp, Op)

    # Advisory cost estimate for the XLA scheduler.
    mm_flops = 2 * K * Np * Dp * 3 * Dp          # input-gate matmul (gi)
    mm_flops += 2 * K * Np * Dp * 3 * Dp         # hidden-gate matmul (gh)
    mm_flops += 2 * Np * 2 * Dp * Op             # fused output matmul
    bytes_accessed = (2 * Np * Dp + 2 * K * Np * Dp + 4 * Np * Op
                      + 2 * (2 * Dp * 3 * Dp + 2 * Dp * Op) + 4 * 4 * Dp)
    cost = pl.CostEstimate(flops=mm_flops,
                           transcendentals=3 * K * Np * Dp,
                           bytes_accessed=bytes_accessed)

    def rep(shape):     # grid-invariant operand: resident, single-buffered
        n = len(shape)
        return pl.BlockSpec(shape, lambda i, _n=n: (0,) * _n,
                            pipeline_mode=pl.Buffered(1))

    out_p = pl.pallas_call(
        eopa_kernel,
        out_shape=jax.ShapeDtypeStruct((Np, Op), jnp.float32),
        grid=(n_tiles,),
        in_specs=[
            pl.BlockSpec((TN, Dp), lambda i: (i, 0)),             # feat_bn (row-tiled)
            pl.BlockSpec((1, K * TN, Dp), lambda i: (i, 0, 0)),   # mailbox (row-tiled)
            rep((Dp, 3 * Dp)),                                    # W_i = [W_ir|W_iz|W_in]^T
            rep((Dp, 3 * Dp)),                                    # W_h = [W_hr|W_hz|W_hn]^T
            rep((1, 3 * Dp)),                                     # folded gi biases
            rep((1, Dp)),                                         # b_hn
            rep((2 * Dp, Op)),                                    # [W_self^T; W_neigh^T]
        ],
        out_specs=pl.BlockSpec((TN, Op), lambda i: (i, 0)),
        scratch_shapes=[pltpu.VMEM((K * TN, 3 * Dp), jnp.float32)],
        compiler_params=pltpu.CompilerParams(
            dimension_semantics=("parallel",),        # megacore / 2 TCs on v7x
            vmem_limit_bytes=48 * 1024 * 1024),
        cost_estimate=cost,
    )(feat_p, mb_p, w_i, w_h, b_i, b_hn, w_out)

    return out_p[:N, :O]


def eopa_reference(feat, nbr_idx, params):
    """Pure-JAX f32 reference mirroring the PyTorch forward."""
    N, D = feat.shape
    K = nbr_idx.shape[1]
    mean = feat.mean(0, keepdims=True)
    var = ((feat - mean) ** 2).mean(0, keepdims=True)
    fbn = (feat - mean) / jnp.sqrt(var + 1e-5) * params["bn_gamma"] + params["bn_beta"]
    mbox = fbn[nbr_idx]                                          # (N, K, D)
    h = jnp.zeros((N, D), jnp.float32)
    for t in range(K):
        x = mbox[:, t, :]
        gi = x @ params["w_ih"].T + params["b_ih"]
        gh = h @ params["w_hh"].T + params["b_hh"]
        r = jax.nn.sigmoid(gi[:, :D] + gh[:, :D])
        z = jax.nn.sigmoid(gi[:, D:2 * D] + gh[:, D:2 * D])
        n = jnp.tanh(gi[:, 2 * D:] + r * gh[:, 2 * D:])
        h = (1.0 - z) * n + z * h
    return fbn @ params["w_self"].T + h @ params["w_neigh"].T


if __name__ == "__main__":
    N, D, O, K = 48, 32, 48, 4   # nodes, input_dim, output_dim, in-degree (seq len)

    key = jax.random.PRNGKey(0)
    (k_feat, k_nbr, k_ih, k_hh, k_bih, k_bhh,
     k_self, k_neigh, k_g, k_b) = jax.random.split(key, 10)

    feat = jax.random.normal(k_feat, (N, D), dtype=jnp.float32)
    nbr_idx = jax.random.randint(k_nbr, (N, K), 0, N, dtype=jnp.int32)

    s = 0.1
    params = {
        "bn_gamma": 1.0 + s * jax.random.normal(k_g, (D,), dtype=jnp.float32),
        "bn_beta": s * jax.random.normal(k_b, (D,), dtype=jnp.float32),
        "w_ih": s * jax.random.normal(k_ih, (3 * D, D), dtype=jnp.float32),
        "w_hh": s * jax.random.normal(k_hh, (3 * D, D), dtype=jnp.float32),
        "b_ih": s * jax.random.normal(k_bih, (3 * D,), dtype=jnp.float32),
        "b_hh": s * jax.random.normal(k_bhh, (3 * D,), dtype=jnp.float32),
        "w_self": s * jax.random.normal(k_self, (O, D), dtype=jnp.float32),
        "w_neigh": s * jax.random.normal(k_neigh, (O, D), dtype=jnp.float32),
    }

    out = jax.block_until_ready(eopa_forward(feat, nbr_idx, params))
    ref = jax.block_until_ready(eopa_reference(feat, nbr_idx, params))

    assert out.shape == (N, O)
    # bf16 MXU operands with f32 accumulation -> compare against the f32 reference
    # with a correspondingly relaxed tolerance.
    assert jnp.allclose(out, ref, atol=3e-2, rtol=3e-2), "mismatch vs reference"
    print("KERNEL_OK")
</pallas_src>

<mosaic_0001>
module attributes {stable_mosaic.version = 11 : i64} {
  func.func @eopa_kernel(%arg0: i32, %arg1: memref<32x128xbf16, #tpu.memory_space<vmem>>, %arg2: memref<1x128x128xbf16, #tpu.memory_space<vmem>>, %arg3: memref<128x384xbf16, #tpu.memory_space<vmem>>, %arg4: memref<128x384xbf16, #tpu.memory_space<vmem>>, %arg5: memref<1x384xf32, #tpu.memory_space<vmem>>, %arg6: memref<1x128xf32, #tpu.memory_space<vmem>>, %arg7: memref<256x128xbf16, #tpu.memory_space<vmem>>, %arg8: memref<32x128xf32, #tpu.memory_space<vmem>>, %arg9: memref<128x384xf32, #tpu.memory_space<vmem>>) attributes {dimension_semantics = [#tpu.dimension_semantics<parallel>], iteration_bounds = array<i64: 2>, scalar_prefetch = 0 : i64, scratch_operands = 1 : i64, tpu.core_type = #tpu.core_type<tc>, window_params = [{transform_indices = @transform_0, window_bounds = array<i64: 32, 128>}, {transform_indices = @transform_1, window_bounds = array<i64: 1, 128, 128>}, {pipeline_mode = #tpu.pipeline_mode<synchronous>, transform_indices = @transform_2, window_bounds = array<i64: 128, 384>}, {pipeline_mode = #tpu.pipeline_mode<synchronous>, transform_indices = @transform_3, window_bounds = array<i64: 128, 384>}, {pipeline_mode = #tpu.pipeline_mode<synchronous>, transform_indices = @transform_4, window_bounds = array<i64: 1, 384>}, {pipeline_mode = #tpu.pipeline_mode<synchronous>, transform_indices = @transform_5, window_bounds = array<i64: 1, 128>}, {pipeline_mode = #tpu.pipeline_mode<synchronous>, transform_indices = @transform_6, window_bounds = array<i64: 256, 128>}, {transform_indices = @transform_7, window_bounds = array<i64: 32, 128>}]} {
    %c0 = arith.constant 0 : index
    %c0_0 = arith.constant 0 : index
    %c0_1 = arith.constant 0 : index
    %0 = vector.load %arg2[%c0, %c0_0, %c0_1] : memref<1x128x128xbf16, #tpu.memory_space<vmem>>, vector<1x128x128xbf16>
    %1 = vector.shape_cast %0 : vector<1x128x128xbf16> to vector<128x128xbf16>
    %c0_2 = arith.constant 0 : index
    %c0_3 = arith.constant 0 : index
    %2 = vector.load %arg3[%c0_2, %c0_3] : memref<128x384xbf16, #tpu.memory_space<vmem>>, vector<128x384xbf16>
    %cst = arith.constant dense<0.000000e+00> : vector<128x384xf32>
    %3 = tpu.matmul %1, %2, %cst {dimension_numbers = #tpu.dot_dimension_numbers<[1], [0], [0], [1], [0, 0, 1, 1], [], []>} : vector<128x128xbf16>, vector<128x384xbf16>, vector<128x384xf32> -> vector<128x384xf32>
    %c0_4 = arith.constant 0 : index
    %c0_5 = arith.constant 0 : index
    %4 = vector.load %arg5[%c0_4, %c0_5] : memref<1x384xf32, #tpu.memory_space<vmem>>, vector<1x384xf32>
    %5 = vector.broadcast %4 : vector<1x384xf32> to vector<128x384xf32>
    %6 = arith.addf %3, %5 : vector<128x384xf32>
    %c0_6 = arith.constant 0 : index
    %c0_7 = arith.constant 0 : index
    %7 = vector.load %arg9[%c0_6, %c0_7] : memref<128x384xf32, #tpu.memory_space<vmem>>, vector<128x384xf32>
    tpu.vector_store %arg9[%c0_6, %c0_7], %6 {strides = array<i32>} : memref<128x384xf32, #tpu.memory_space<vmem>>, vector<128x384xf32>,
    %c0_8 = arith.constant 0 : index
    %c0_9 = arith.constant 0 : index
    %8 = vector.load %arg4[%c0_8, %c0_9] : memref<128x384xbf16, #tpu.memory_space<vmem>>, vector<128x384xbf16>
    %c0_10 = arith.constant 0 : index
    %c0_11 = arith.constant 0 : index
    %9 = vector.load %arg6[%c0_10, %c0_11] : memref<1x128xf32, #tpu.memory_space<vmem>>, vector<1x128xf32>
    %cst_12 = arith.constant 0.000000e+00 : f32
    %10 = vector.broadcast %cst_12 : f32 to vector<32x128xf32>
    %c0_13 = arith.constant 0 : index
    %c0_14 = arith.constant 0 : index
    %11 = vector.load %arg9[%c0_13, %c0_14] : memref<128x384xf32, #tpu.memory_space<vmem>>, vector<32x384xf32>
    %12 = arith.truncf %10 : vector<32x128xf32> to vector<32x128xbf16>
    %cst_15 = arith.constant dense<0.000000e+00> : vector<32x384xf32>
    %13 = tpu.matmul %12, %8, %cst_15 {dimension_numbers = #tpu.dot_dimension_numbers<[1], [0], [0], [1], [0, 0, 1, 1], [], []>} : vector<32x128xbf16>, vector<128x384xbf16>, vector<32x384xf32> -> vector<32x384xf32>
    %14 = vector.extract_strided_slice %11 {offsets = [0, 0], sizes = [32, 128], strides = [1, 1]} : vector<32x384xf32> to vector<32x128xf32>
    %15 = vector.extract_strided_slice %13 {offsets = [0, 0], sizes = [32, 128], strides = [1, 1]} : vector<32x384xf32> to vector<32x128xf32>
    %16 = arith.addf %14, %15 : vector<32x128xf32>
    %cst_16 = arith.constant 5.000000e-01 : f32
    %17 = vector.broadcast %cst_16 : f32 to vector<32x128xf32>
    %18 = arith.mulf %17, %16 : vector<32x128xf32>
    %19 = math.tanh %18 : vector<32x128xf32>
    %cst_17 = arith.constant 1.000000e+00 : f32
    %20 = vector.broadcast %cst_17 : f32 to vector<32x128xf32>
    %21 = arith.addf %19, %20 : vector<32x128xf32>
    %cst_18 = arith.constant 5.000000e-01 : f32
    %22 = vector.broadcast %cst_18 : f32 to vector<32x128xf32>
    %23 = arith.mulf %22, %21 : vector<32x128xf32>
    %24 = vector.extract_strided_slice %11 {offsets = [0, 128], sizes = [32, 128], strides = [1, 1]} : vector<32x384xf32> to vector<32x128xf32>
    %25 = vector.extract_strided_slice %13 {offsets = [0, 128], sizes = [32, 128], strides = [1, 1]} : vector<32x384xf32> to vector<32x128xf32>
    %26 = arith.addf %24, %25 : vector<32x128xf32>
    %cst_19 = arith.constant 5.000000e-01 : f32
    %27 = vector.broadcast %cst_19 : f32 to vector<32x128xf32>
    %28 = arith.mulf %27, %26 : vector<32x128xf32>
    %29 = math.tanh %28 : vector<32x128xf32>
    %cst_20 = arith.constant 1.000000e+00 : f32
    %30 = vector.broadcast %cst_20 : f32 to vector<32x128xf32>
    %31 = arith.addf %29, %30 : vector<32x128xf32>
    %cst_21 = arith.constant 5.000000e-01 : f32
    %32 = vector.broadcast %cst_21 : f32 to vector<32x128xf32>
    %33 = arith.mulf %32, %31 : vector<32x128xf32>
    %34 = vector.extract_strided_slice %11 {offsets = [0, 256], sizes = [32, 128], strides = [1, 1]} : vector<32x384xf32> to vector<32x128xf32>
    %35 = vector.extract_strided_slice %13 {offsets = [0, 256], sizes = [32, 128], strides = [1, 1]} : vector<32x384xf32> to vector<32x128xf32>
    %36 = vector.broadcast %9 : vector<1x128xf32> to vector<32x128xf32>
    %37 = arith.addf %35, %36 : vector<32x128xf32>
    %38 = arith.mulf %23, %37 : vector<32x128xf32>
    %39 = arith.addf %34, %38 : vector<32x128xf32>
    %40 = math.tanh %39 : vector<32x128xf32>
    %cst_22 = arith.constant 1.000000e+00 : f32
    %41 = vector.broadcast %cst_22 : f32 to vector<32x128xf32>
    %42 = arith.subf %41, %33 : vector<32x128xf32>
    %43 = arith.mulf %42, %40 : vector<32x128xf32>
    %44 = arith.mulf %33, %10 : vector<32x128xf32>
    %45 = arith.addf %43, %44 : vector<32x128xf32>
    %c32 = arith.constant 32 : index
    %c0_23 = arith.constant 0 : index
    %46 = vector.load %arg9[%c32, %c0_23] : memref<128x384xf32, #tpu.memory_space<vmem>>, vector<32x384xf32>
    %47 = arith.truncf %45 : vector<32x128xf32> to vector<32x128xbf16>
    %cst_24 = arith.constant dense<0.000000e+00> : vector<32x384xf32>
    %48 = tpu.matmul %47, %8, %cst_24 {dimension_numbers = #tpu.dot_dimension_numbers<[1], [0], [0], [1], [0, 0, 1, 1], [], []>} : vector<32x128xbf16>, vector<128x384xbf16>, vector<32x384xf32> -> vector<32x384xf32>
    %49 = vector.extract_strided_slice %46 {offsets = [0, 0], sizes = [32, 128], strides = [1, 1]} : vector<32x384xf32> to vector<32x128xf32>
    %50 = vector.extract_strided_slice %48 {offsets = [0, 0], sizes = [32, 128], strides = [1, 1]} : vector<32x384xf32> to vector<32x128xf32>
    %51 = arith.addf %49, %50 : vector<32x128xf32>
    %cst_25 = arith.constant 5.000000e-01 : f32
    %52 = vector.broadcast %cst_25 : f32 to vector<32x128xf32>
    %53 = arith.mulf %52, %51 : vector<32x128xf32>
    %54 = math.tanh %53 : vector<32x128xf32>
    %cst_26 = arith.constant 1.000000e+00 : f32
    %55 = vector.broadcast %cst_26 : f32 to vector<32x128xf32>
    %56 = arith.addf %54, %55 : vector<32x128xf32>
    %cst_27 = arith.constant 5.000000e-01 : f32
    %57 = vector.broadcast %cst_27 : f32 to vector<32x128xf32>
    %58 = arith.mulf %57, %56 : vector<32x128xf32>
    %59 = vector.extract_strided_slice %46 {offsets = [0, 128], sizes = [32, 128], strides = [1, 1]} : vector<32x384xf32> to vector<32x128xf32>
    %60 = vector.extract_strided_slice %48 {offsets = [0, 128], sizes = [32, 128], strides = [1, 1]} : vector<32x384xf32> to vector<32x128xf32>
    %61 = arith.addf %59, %60 : vector<32x128xf32>
    %cst_28 = arith.constant 5.000000e-01 : f32
    %62 = vector.broadcast %cst_28 : f32 to vector<32x128xf32>
    %63 = arith.mulf %62, %61 : vector<32x128xf32>
    %64 = math.tanh %63 : vector<32x128xf32>
    %cst_29 = arith.constant 1.000000e+00 : f32
    %65 = vector.broadcast %cst_29 : f32 to vector<32x128xf32>
    %66 = arith.addf %64, %65 : vector<32x128xf32>
    %cst_30 = arith.constant 5.000000e-01 : f32
    %67 = vector.broadcast %cst_30 : f32 to vector<32x128xf32>
    %68 = arith.mulf %67, %66 : vector<32x128xf32>
    %69 = vector.extract_strided_slice %46 {offsets = [0, 256], sizes = [32, 128], strides = [1, 1]} : vector<32x384xf32> to vector<32x128xf32>
    %70 = vector.extract_strided_slice %48 {offsets = [0, 256], sizes = [32, 128], strides = [1, 1]} : vector<32x384xf32> to vector<32x128xf32>
    %71 = vector.broadcast %9 : vector<1x128xf32> to vector<32x128xf32>
    %72 = arith.addf %70, %71 : vector<32x128xf32>
    %73 = arith.mulf %58, %72 : vector<32x128xf32>
    %74 = arith.addf %69, %73 : vector<32x128xf32>
    %75 = math.tanh %74 : vector<32x128xf32>
    %cst_31 = arith.constant 1.000000e+00 : f32
    %76 = vector.broadcast %cst_31 : f32 to vector<32x128xf32>
    %77 = arith.subf %76, %68 : vector<32x128xf32>
    %78 = arith.mulf %77, %75 : vector<32x128xf32>
    %79 = arith.mulf %68, %45 : vector<32x128xf32>
    %80 = arith.addf %78, %79 : vector<32x128xf32>
    %c64 = arith.constant 64 : index
    %c0_32 = arith.constant 0 : index
    %81 = vector.load %arg9[%c64, %c0_32] : memref<128x384xf32, #tpu.memory_space<vmem>>, vector<32x384xf32>
    %82 = arith.truncf %80 : vector<32x128xf32> to vector<32x128xbf16>
    %cst_33 = arith.constant dense<0.000000e+00> : vector<32x384xf32>
    %83 = tpu.matmul %82, %8, %cst_33 {dimension_numbers = #tpu.dot_dimension_numbers<[1], [0], [0], [1], [0, 0, 1, 1], [], []>} : vector<32x128xbf16>, vector<128x384xbf16>, vector<32x384xf32> -> vector<32x384xf32>
    %84 = vector.extract_strided_slice %81 {offsets = [0, 0], sizes = [32, 128], strides = [1, 1]} : vector<32x384xf32> to vector<32x128xf32>
    %85 = vector.extract_strided_slice %83 {offsets = [0, 0], sizes = [32, 128], strides = [1, 1]} : vector<32x384xf32> to vector<32x128xf32>
    %86 = arith.addf %84, %85 : vector<32x128xf32>
    %cst_34 = arith.constant 5.000000e-01 : f32
    %87 = vector.broadcast %cst_34 : f32 to vector<32x128xf32>
    %88 = arith.mulf %87, %86 : vector<32x128xf32>
    %89 = math.tanh %88 : vector<32x128xf32>
    %cst_35 = arith.constant 1.000000e+00 : f32
    %90 = vector.broadcast %cst_35 : f32 to vector<32x128xf32>
    %91 = arith.addf %89, %90 : vector<32x128xf32>
    %cst_36 = arith.constant 5.000000e-01 : f32
    %92 = vector.broadcast %cst_36 : f32 to vector<32x128xf32>
    %93 = arith.mulf %92, %91 : vector<32x128xf32>
    %94 = vector.extract_strided_slice %81 {offsets = [0, 128], sizes = [32, 128], strides = [1, 1]} : vector<32x384xf32> to vector<32x128xf32>
    %95 = vector.extract_strided_slice %83 {offsets = [0, 128], sizes = [32, 128], strides = [1, 1]} : vector<32x384xf32> to vector<32x128xf32>
    %96 = arith.addf %94, %95 : vector<32x128xf32>
    %cst_37 = arith.constant 5.000000e-01 : f32
    %97 = vector.broadcast %cst_37 : f32 to vector<32x128xf32>
    %98 = arith.mulf %97, %96 : vector<32x128xf32>
    %99 = math.tanh %98 : vector<32x128xf32>
    %cst_38 = arith.constant 1.000000e+00 : f32
    %100 = vector.broadcast %cst_38 : f32 to vector<32x128xf32>
    %101 = arith.addf %99, %100 : vector<32x128xf32>
    %cst_39 = arith.constant 5.000000e-01 : f32
    %102 = vector.broadcast %cst_39 : f32 to vector<32x128xf32>
    %103 = arith.mulf %102, %101 : vector<32x128xf32>
    %104 = vector.extract_strided_slice %81 {offsets = [0, 256], sizes = [32, 128], strides = [1, 1]} : vector<32x384xf32> to vector<32x128xf32>
    %105 = vector.extract_strided_slice %83 {offsets = [0, 256], sizes = [32, 128], strides = [1, 1]} : vector<32x384xf32> to vector<32x128xf32>
    %106 = vector.broadcast %9 : vector<1x128xf32> to vector<32x128xf32>
    %107 = arith.addf %105, %106 : vector<32x128xf32>
    %108 = arith.mulf %93, %107 : vector<32x128xf32>
    %109 = arith.addf %104, %108 : vector<32x128xf32>
    %110 = math.tanh %109 : vector<32x128xf32>
    %cst_40 = arith.constant 1.000000e+00 : f32
    %111 = vector.broadcast %cst_40 : f32 to vector<32x128xf32>
    %112 = arith.subf %111, %103 : vector<32x128xf32>
    %113 = arith.mulf %112, %110 : vector<32x128xf32>
    %114 = arith.mulf %103, %80 : vector<32x128xf32>
    %115 = arith.addf %113, %114 : vector<32x128xf32>
    %c96 = arith.constant 96 : index
    %c0_41 = arith.constant 0 : index
    %116 = vector.load %arg9[%c96, %c0_41] : memref<128x384xf32, #tpu.memory_space<vmem>>, vector<32x384xf32>
    %117 = arith.truncf %115 : vector<32x128xf32> to vector<32x128xbf16>
    %cst_42 = arith.constant dense<0.000000e+00> : vector<32x384xf32>
    %118 = tpu.matmul %117, %8, %cst_42 {dimension_numbers = #tpu.dot_dimension_numbers<[1], [0], [0], [1], [0, 0, 1, 1], [], []>} : vector<32x128xbf16>, vector<128x384xbf16>, vector<32x384xf32> -> vector<32x384xf32>
    %119 = vector.extract_strided_slice %116 {offsets = [0, 0], sizes = [32, 128], strides = [1, 1]} : vector<32x384xf32> to vector<32x128xf32>
    %120 = vector.extract_strided_slice %118 {offsets = [0, 0], sizes = [32, 128], strides = [1, 1]} : vector<32x384xf32> to vector<32x128xf32>
    %121 = arith.addf %119, %120 : vector<32x128xf32>
    %cst_43 = arith.constant 5.000000e-01 : f32
    %122 = vector.broadcast %cst_43 : f32 to vector<32x128xf32>
    %123 = arith.mulf %122, %121 : vector<32x128xf32>
    %124 = math.tanh %123 : vector<32x128xf32>
    %cst_44 = arith.constant 1.000000e+00 : f32
    %125 = vector.broadcast %cst_44 : f32 to vector<32x128xf32>
    %126 = arith.addf %124, %125 : vector<32x128xf32>
    %cst_45 = arith.constant 5.000000e-01 : f32
    %127 = vector.broadcast %cst_45 : f32 to vector<32x128xf32>
    %128 = arith.mulf %127, %126 : vector<32x128xf32>
    %129 = vector.extract_strided_slice %116 {offsets = [0, 128], sizes = [32, 128], strides = [1, 1]} : vector<32x384xf32> to vector<32x128xf32>
    %130 = vector.extract_strided_slice %118 {offsets = [0, 128], sizes = [32, 128], strides = [1, 1]} : vector<32x384xf32> to vector<32x128xf32>
    %131 = arith.addf %129, %130 : vector<32x128xf32>
    %cst_46 = arith.constant 5.000000e-01 : f32
    %132 = vector.broadcast %cst_46 : f32 to vector<32x128xf32>
    %133 = arith.mulf %132, %131 : vector<32x128xf32>
    %134 = math.tanh %133 : vector<32x128xf32>
    %cst_47 = arith.constant 1.000000e+00 : f32
    %135 = vector.broadcast %cst_47 : f32 to vector<32x128xf32>
    %136 = arith.addf %134, %135 : vector<32x128xf32>
    %cst_48 = arith.constant 5.000000e-01 : f32
    %137 = vector.broadcast %cst_48 : f32 to vector<32x128xf32>
    %138 = arith.mulf %137, %136 : vector<32x128xf32>
    %139 = vector.extract_strided_slice %116 {offsets = [0, 256], sizes = [32, 128], strides = [1, 1]} : vector<32x384xf32> to vector<32x128xf32>
    %140 = vector.extract_strided_slice %118 {offsets = [0, 256], sizes = [32, 128], strides = [1, 1]} : vector<32x384xf32> to vector<32x128xf32>
    %141 = vector.broadcast %9 : vector<1x128xf32> to vector<32x128xf32>
    %142 = arith.addf %140, %141 : vector<32x128xf32>
    %143 = arith.mulf %128, %142 : vector<32x128xf32>
    %144 = arith.addf %139, %143 : vector<32x128xf32>
    %145 = math.tanh %144 : vector<32x128xf32>
    %cst_49 = arith.constant 1.000000e+00 : f32
    %146 = vector.broadcast %cst_49 : f32 to vector<32x128xf32>
    %147 = arith.subf %146, %138 : vector<32x128xf32>
    %148 = arith.mulf %147, %145 : vector<32x128xf32>
    %149 = arith.mulf %138, %115 : vector<32x128xf32>
    %150 = arith.addf %148, %149 : vector<32x128xf32>
    %c0_50 = arith.constant 0 : index
    %c0_51 = arith.constant 0 : index
    %151 = vector.load %arg1[%c0_50, %c0_51] : memref<32x128xbf16, #tpu.memory_space<vmem>>, vector<32x128xbf16>
    %152 = arith.truncf %150 : vector<32x128xf32> to vector<32x128xbf16>
    %153 = tpu.concatenate %151, %152 in 1 : vector<32x128xbf16>, vector<32x128xbf16> -> vector<32x256xbf16>
    %c0_52 = arith.constant 0 : index
    %c0_53 = arith.constant 0 : index
    %154 = vector.load %arg7[%c0_52, %c0_53] : memref<256x128xbf16, #tpu.memory_space<vmem>>, vector<256x128xbf16>
    %cst_54 = arith.constant dense<0.000000e+00> : vector<32x128xf32>
    %155 = tpu.matmul %153, %154, %cst_54 {dimension_numbers = #tpu.dot_dimension_numbers<[1], [0], [0], [1], [0, 0, 1, 1], [], []>} : vector<32x256xbf16>, vector<256x128xbf16>, vector<32x128xf32> -> vector<32x128xf32>
    %c0_55 = arith.constant 0 : index
    %c0_56 = arith.constant 0 : index
    %156 = vector.load %arg8[%c0_55, %c0_56] : memref<32x128xf32, #tpu.memory_space<vmem>>, vector<32x128xf32>
    tpu.vector_store %arg8[%c0_55, %c0_56], %155 {strides = array<i32>} : memref<32x128xf32, #tpu.memory_space<vmem>>, vector<32x128xf32>,
    return
  }
  func.func @transform_0(%arg0: i32) -> (i32, i32) {
    %c0_i32 = arith.constant 0 : i32
    %c0_i32_0 = arith.constant 0 : i32
    return %arg0, %c0_i32 : i32, i32
  }
  func.func @transform_1(%arg0: i32) -> (i32, i32, i32) {
    %c0_i32 = arith.constant 0 : i32
    %c0_i32_0 = arith.constant 0 : i32
    %c0_i32_1 = arith.constant 0 : i32
    return %arg0, %c0_i32, %c0_i32_0 : i32, i32, i32
  }
  func.func @transform_2(%arg0: i32) -> (i32, i32) {
    %c0_i32 = arith.constant 0 : i32
    %c0_i32_0 = arith.constant 0 : i32
    %c0_i32_1 = arith.constant 0 : i32
    return %c0_i32, %c0_i32_0 : i32, i32
  }
  func.func @transform_3(%arg0: i32) -> (i32, i32) {
    %c0_i32 = arith.constant 0 : i32
    %c0_i32_0 = arith.constant 0 : i32
    %c0_i32_1 = arith.constant 0 : i32
    return %c0_i32, %c0_i32_0 : i32, i32
  }
  func.func @transform_4(%arg0: i32) -> (i32, i32) {
    %c0_i32 = arith.constant 0 : i32
    %c0_i32_0 = arith.constant 0 : i32
    %c0_i32_1 = arith.constant 0 : i32
    return %c0_i32, %c0_i32_0 : i32, i32
  }
  func.func @transform_5(%arg0: i32) -> (i32, i32) {
    %c0_i32 = arith.constant 0 : i32
    %c0_i32_0 = arith.constant 0 : i32
    %c0_i32_1 = arith.constant 0 : i32
    return %c0_i32, %c0_i32_0 : i32, i32
  }
  func.func @transform_6(%arg0: i32) -> (i32, i32) {
    %c0_i32 = arith.constant 0 : i32
    %c0_i32_0 = arith.constant 0 : i32
    %c0_i32_1 = arith.constant 0 : i32
    return %c0_i32, %c0_i32_0 : i32, i32
  }
  func.func @transform_7(%arg0: i32) -> (i32, i32) {
    %c0_i32 = arith.constant 0 : i32
    %c0_i32_0 = arith.constant 0 : i32
    return %arg0, %c0_i32 : i32, i32
  }
}

</mosaic_0001>

<llo_original>
// kernel: tpu_custom_call.1
$region0: #{tpu_custom_call.1}
  #allocation0 [shape = 'u32[]', space=smem, size = 0x4, offset = 0x4, fixed_abs, tag = 'smem constant byte address 0x4 - core index']
  #allocation1 [shape = 'u32[144,128]{1,0:T(1,128)}', space=vmem, size = 0x12000, scoped, tag = 'internal scratch']
  #allocation2 [shape = 'f32[128,384]{1,0:T(8,128)}', space=vmem, size = 0x30000, scoped, tag = 'scratch operand']
  %s0 = inlined_call_operand.hbm [shape: bf16[64,128], index: 0, kind: input, shape index: {}]
  %s1 = inlined_call_operand.hbm [shape: bf16[2,128,128], index: 1, kind: input, shape index: {}]
  %s2 = inlined_call_operand.hbm [shape: bf16[128,384], index: 2, kind: input, shape index: {}]
  %s3 = inlined_call_operand.hbm [shape: bf16[128,384], index: 3, kind: input, shape index: {}]
  %s4 = inlined_call_operand.vmem [shape: f32[1,384], index: 4, kind: input, shape index: {}]
  %s5 = inlined_call_operand.vmem [shape: f32[1,128], index: 5, kind: input, shape index: {}]
  %s6 = inlined_call_operand.hbm [shape: bf16[256,128], index: 6, kind: input, shape index: {}]
  %s7 = inlined_call_operand.hbm [shape: f32[64,128], index: 7, kind: output, shape index: {}]
  %s8 = sld [smem:[#allocation0]]
  $region81: #{tpu_custom_call.1} parent=0
    _
  %s10 = ssub.s32 1, %s8
  %s11 = scalar_select 0, %s10, %s8
  $region1: #{tpu_custom_call.1} parent=0
    #allocation3 [shape = 'u8[16384]{0}', space=vmem, size = 0x4000, scoped, tag = 'input window, operand 0']
    #allocation4 [shape = 's32[2]{0}', space=sflag, size = 0x8, scoped, tag = 'scoped memory for tpu_custom_call.1']
    #allocation5 [shape = 's32[2]{0}', space=sflag, size = 0x8, scoped, tag = 'scoped memory for tpu_custom_call.1']
    #allocation6 [shape = 'u8[65536]{0}', space=vmem, size = 0x10000, scoped, tag = 'input window, operand 1']
    #allocation7 [shape = 's32[2]{0}', space=sflag, size = 0x8, scoped, tag = 'scoped memory for tpu_custom_call.1']
    #allocation8 [shape = 'u8[98304]{0}', space=vmem, size = 0x18000, scoped, tag = 'input window, operand 2, single buffered']
    #allocation9 [shape = 'u8[98304]{0}', space=vmem, size = 0x18000, scoped, tag = 'input window, operand 3, single buffered']
    #allocation10 [shape = 's32[1]{0}', space=sflag, size = 0x4, scoped, tag = 'scoped memory for tpu_custom_call.1']
    #allocation11 [shape = 'u8[65536]{0}', space=vmem, size = 0x10000, scoped, tag = 'input window, operand 6, single buffered']
    #allocation12 [shape = 'u8[32768]{0}', space=vmem, size = 0x8000, scoped, tag = 'output window, operand 0']
    %12 = vsyncpa [#allocation4], 0
    %s13 = scalar_lea.sflag [#allocation4], 1
    %14 = vsyncpa %s13, 0
    %15 = vsyncpa [#allocation7], 0
    %s16 = scalar_lea.sflag [#allocation7], 1
    %17 = vsyncpa %s16, 0
    %18 = vsyncpa [#allocation10], 0
    %19 = vsyncpa [#allocation5], 0
    %s20 = scalar_lea.sflag [#allocation5], 1
    %21 = vsyncpa %s20, 0
    loop: start=0, step=1, limit=4
    $region2: #{tpu_custom_call.1} parent=1 // loop_pre_header
      _
    $region3: #{tpu_custom_call.1} parent=1 // loop_header
      %s23 = sphi 0, %s27
      %p24 = scmp.ge.s32.totalorder %s23, 4
      %s33 = sphi 0, %s35
      %s36 = sphi 0, %s33
      %s37 = sphi 0, %s36
      %s53 = sphi 0, %s37
      %s59 = sphi 0, %s61
      %s62 = sphi 0, %s59
      %s63 = sphi 0, %s62
      %s79 = sphi 0, %s63
      %s83 = sphi 0, %s83
      %s85 = sphi 0, %s83
      %s86 = sphi 0, %s85
      %s100 = sphi 0, %s86
      %s104 = sphi 0, %s104
      %s106 = sphi 0, %s104
      %s107 = sphi 0, %s106
      %s121 = sphi 0, %s107
      %s125 = sphi 0, %s125
      %s127 = sphi 0, %s125
      %s128 = sphi 0, %s127
      %s142 = sphi 0, %s128
      %s146 = sphi 0, %s146
      %s148 = sphi 0, %s146
      %s149 = sphi 0, %s148
      %s163 = sphi 0, %s149
      %s167 = sphi 0, %s167
      %s169 = sphi 0, %s167
      %s170 = sphi 0, %s169
      %s184 = sphi 0, %s170
      %s190 = sphi 0, %s192
      %s193 = sphi 0, %s190
      %s194 = sphi 0, %s193
      %s210 = sphi 0, %s194
    $region4: #{tpu_custom_call.1} parent=1 // loop_header_branch
      %26 = sbr.rel (%p24) target = $region8
    $region5: #{tpu_custom_call.1} parent=1 // loop_body
      %s28 = ssub.s32 %s23, 1
      %s29 = ssub.s32 %s23, 2
      %s30 = sadd.s32 %s23, 1
      %s31 = ssub.s32 %s23, %s30
      %p32 = scmp.eq.s32.totalorder %s31, 0
      %s34 = sadd.s32 %s33, 1
      %s35 = scalar_select %p32, %s33, %s34
      %p38 = pneg %p32
      %p39 = scmp.eq.s32.totalorder %s23, 1
      %p40 = por %p38, %p39
      %p41 = scmp.ne.s32.totalorder %s33, %s36
      %p42 = scmp.eq.s32.totalorder %s23, 0
      %p43 = por %p41, %p42
      %p44 = scmp.ne.s32.totalorder %s33, %s36
      %p45 = scmp.eq.s32.totalorder %s28, 1
      %p46 = por %p44, %p45
      %p47 = scmp.ne.s32.totalorder %s36, %s37
      %p48 = scmp.eq.s32.totalorder %s28, 0
      %p49 = por %p47, %p48
      %p50 = scmp.ne.s32.totalorder %s36, %s37
      %p51 = scmp.eq.s32.totalorder %s29, 1
      %p52 = por %p50, %p51
      %p54 = scmp.ne.s32.totalorder %s37, %s53
      %p55 = scmp.eq.s32.totalorder %s29, 0
      %p56 = por %p54, %p55
      %s57 = ssub.s32 %s23, %s30
      %p58 = scmp.eq.s32.totalorder %s57, 0
      %s60 = sadd.s32 %s59, 1
      %s61 = scalar_select %p58, %s59, %s60
      %p64 = pneg %p58
      %p65 = scmp.eq.s32.totalorder %s23, 1
      %p66 = por %p64, %p65
      %p67 = scmp.ne.s32.totalorder %s59, %s62
      %p68 = scmp.eq.s32.totalorder %s23, 0
      %p69 = por %p67, %p68
      %p70 = scmp.ne.s32.totalorder %s59, %s62
      %p71 = scmp.eq.s32.totalorder %s28, 1
      %p72 = por %p70, %p71
      %p73 = scmp.ne.s32.totalorder %s62, %s63
      %p74 = scmp.eq.s32.totalorder %s28, 0
      %p75 = por %p73, %p74
      %p76 = scmp.ne.s32.totalorder %s62, %s63
      %p77 = scmp.eq.s32.totalorder %s29, 1
      %p78 = por %p76, %p77
      %p80 = scmp.ne.s32.totalorder %s63, %s79
      %p81 = scmp.eq.s32.totalorder %s29, 0
      %p82 = por %p80, %p81
      %s84 = sadd.s32 %s83, 1
      %p87 = scmp.eq.s32.totalorder %s23, 1
      %p88 = scmp.ne.s32.totalorder %s83, %s85
      %p89 = scmp.eq.s32.totalorder %s23, 0
      %p90 = por %p88, %p89
      %p91 = scmp.ne.s32.totalorder %s83, %s85
      %p92 = scmp.eq.s32.totalorder %s28, 1
      %p93 = por %p91, %p92
      %p94 = scmp.ne.s32.totalorder %s85, %s86
      %p95 = scmp.eq.s32.totalorder %s28, 0
      %p96 = por %p94, %p95
      %p97 = scmp.ne.s32.totalorder %s85, %s86
      %p98 = scmp.eq.s32.totalorder %s29, 1
      %p99 = por %p97, %p98
      %p101 = scmp.ne.s32.totalorder %s86, %s100
      %p102 = scmp.eq.s32.totalorder %s29, 0
      %p103 = por %p101, %p102
      %s105 = sadd.s32 %s104, 1
      %p108 = scmp.eq.s32.totalorder %s23, 1
      %p109 = scmp.ne.s32.totalorder %s104, %s106
      %p110 = scmp.eq.s32.totalorder %s23, 0
      %p111 = por %p109, %p110
      %p112 = scmp.ne.s32.totalorder %s104, %s106
      %p113 = scmp.eq.s32.totalorder %s28, 1
      %p114 = por %p112, %p113
      %p115 = scmp.ne.s32.totalorder %s106, %s107
      %p116 = scmp.eq.s32.totalorder %s28, 0
      %p117 = por %p115, %p116
      %p118 = scmp.ne.s32.totalorder %s106, %s107
      %p119 = scmp.eq.s32.totalorder %s29, 1
      %p120 = por %p118, %p119
      %p122 = scmp.ne.s32.totalorder %s107, %s121
      %p123 = scmp.eq.s32.totalorder %s29, 0
      %p124 = por %p122, %p123
      %s126 = sadd.s32 %s125, 1
      %p129 = scmp.eq.s32.totalorder %s23, 1
      %p130 = scmp.ne.s32.totalorder %s125, %s127
      %p131 = scmp.eq.s32.totalorder %s23, 0
      %p132 = por %p130, %p131
      %p133 = scmp.ne.s32.totalorder %s125, %s127
      %p134 = scmp.eq.s32.totalorder %s28, 1
      %p135 = por %p133, %p134
      %p136 = scmp.ne.s32.totalorder %s127, %s128
      %p137 = scmp.eq.s32.totalorder %s28, 0
      %p138 = por %p136, %p137
      %p139 = scmp.ne.s32.totalorder %s127, %s128
      %p140 = scmp.eq.s32.totalorder %s29, 1
      %p141 = por %p139, %p140
      %p143 = scmp.ne.s32.totalorder %s128, %s142
      %p144 = scmp.eq.s32.totalorder %s29, 0
      %p145 = por %p143, %p144
      %s147 = sadd.s32 %s146, 1
      %p150 = scmp.eq.s32.totalorder %s23, 1
      %p151 = scmp.ne.s32.totalorder %s146, %s148
      %p152 = scmp.eq.s32.totalorder %s23, 0
      %p153 = por %p151, %p152
      %p154 = scmp.ne.s32.totalorder %s146, %s148
      %p155 = scmp.eq.s32.totalorder %s28, 1
      %p156 = por %p154, %p155
      %p157 = scmp.ne.s32.totalorder %s148, %s149
      %p158 = scmp.eq.s32.totalorder %s28, 0
      %p159 = por %p157, %p158
      %p160 = scmp.ne.s32.totalorder %s148, %s149
      %p161 = scmp.eq.s32.totalorder %s29, 1
      %p162 = por %p160, %p161
      %p164 = scmp.ne.s32.totalorder %s149, %s163
      %p165 = scmp.eq.s32.totalorder %s29, 0
      %p166 = por %p164, %p165
      %s168 = sadd.s32 %s167, 1
      %p171 = scmp.eq.s32.totalorder %s23, 1
      %p172 = scmp.ne.s32.totalorder %s167, %s169
      %p173 = scmp.eq.s32.totalorder %s23, 0
      %p174 = por %p172, %p173
      %p175 = scmp.ne.s32.totalorder %s167, %s169
      %p176 = scmp.eq.s32.totalorder %s28, 1
      %p177 = por %p175, %p176
      %p178 = scmp.ne.s32.totalorder %s169, %s170
      %p179 = scmp.eq.s32.totalorder %s28, 0
      %p180 = por %p178, %p179
      %p181 = scmp.ne.s32.totalorder %s169, %s170
      %p182 = scmp.eq.s32.totalorder %s29, 1
      %p183 = por %p181, %p182
      %p185 = scmp.ne.s32.totalorder %s170, %s184
      %p186 = scmp.eq.s32.totalorder %s29, 0
      %p187 = por %p185, %p186
      %s188 = ssub.s32 %s23, %s30
      %p189 = scmp.eq.s32.totalorder %s188, 0
      %s191 = sadd.s32 %s190, 1
      %s192 = scalar_select %p189, %s190, %s191
      %p195 = pneg %p189
      %p196 = scmp.eq.s32.totalorder %s23, 1
      %p197 = por %p195, %p196
      %p198 = scmp.ne.s32.totalorder %s190, %s193
      %p199 = scmp.eq.s32.totalorder %s23, 0
      %p200 = por %p198, %p199
      %p201 = scmp.ne.s32.totalorder %s190, %s193
      %p202 = scmp.eq.s32.totalorder %s28, 1
      %p203 = por %p201, %p202
      %p204 = scmp.ne.s32.totalorder %s193, %s194
      %p205 = scmp.eq.s32.totalorder %s28, 0
      %p206 = por %p204, %p205
      %p207 = scmp.ne.s32.totalorder %s193, %s194
      %p208 = scmp.eq.s32.totalorder %s29, 1
      %p209 = por %p207, %p208
      %p211 = scmp.ne.s32.totalorder %s194, %s210
      %p212 = scmp.eq.s32.totalorder %s29, 0
      %p213 = por %p211, %p212
      %p214 = scmp.le.s32.totalorder 1, %s23
      %p215 = scmp.lt.s32.totalorder %s23, 3
      %p216 = pnand %p214, %p215
      %p217 = pneg %p216
      // Predicated region
      $region9: #{tpu_custom_call.1} parent=5 // pred_check
        _
      $region10: #{tpu_custom_call.1} parent=5 // pred_check_branch
        %219 = sbr.rel (%p216) target = $region12
      $region11: #{tpu_custom_call.1} parent=5 // pred_region
        %s220 = ssub.s32 %s23, 1
        // Predicated region
        $region13: #{tpu_custom_call.1} parent=11 // pred_check
          %p221 = pneg %p96
        $region14: #{tpu_custom_call.1} parent=11 // pred_check_branch
          %223 = sbr.rel (%p221) target = $region16
        $region15: #{tpu_custom_call.1} parent=11 // pred_region
          %s225 = ssub.s32 3072, 3072
          %226 = vsyncadd [#allocation7], %s225
          %s227 = sshll.u32 [#allocation8], 4
          %s228 = int_to_ptr.vmem [resolvable:$true] %s227
          %233 = dma.hbm_to_vmem [thread:$0]  %s2, 3072, %s228, [#allocation7], 192, 192, 12
        $region16: #{tpu_custom_call.1} parent=11 // pred_fallthru
          _
        // Predicated region
        $region17: #{tpu_custom_call.1} parent=11 // pred_check
          %p234 = pneg %p117
        $region18: #{tpu_custom_call.1} parent=11 // pred_check_branch
          %236 = sbr.rel (%p234) target = $region20
        $region19: #{tpu_custom_call.1} parent=11 // pred_region
          %s238 = ssub.s32 3072, 3072
          %239 = vsyncadd [#allocation10], %s238
          %s240 = sshll.u32 [#allocation9], 4
          %s241 = int_to_ptr.vmem [resolvable:$true] %s240
          %246 = dma.hbm_to_vmem [thread:$0]  %s3, 3072, %s241, [#allocation10], 192, 192, 12
        $region20: #{tpu_custom_call.1} parent=11 // pred_fallthru
          _
        // Predicated region
        $region21: #{tpu_custom_call.1} parent=11 // pred_check
          %p247 = pneg %p138
        $region22: #{tpu_custom_call.1} parent=11 // pred_check_branch
          %249 = sbr.rel (%p247) target = $region24
        $region23: #{tpu_custom_call.1} parent=11 // pred_region
          _
        $region24: #{tpu_custom_call.1} parent=11 // pred_fallthru
          _
        // Predicated region
        $region25: #{tpu_custom_call.1} parent=11 // pred_check
          %p250 = pneg %p159
        $region26: #{tpu_custom_call.1} parent=11 // pred_check_branch
          %252 = sbr.rel (%p250) target = $region28
        $region27: #{tpu_custom_call.1} parent=11 // pred_region
          _
        $region28: #{tpu_custom_call.1} parent=11 // pred_fallthru
          _
        // Predicated region
        $region29: #{tpu_custom_call.1} parent=11 // pred_check
          %p253 = pneg %p180
        $region30: #{tpu_custom_call.1} parent=11 // pred_check_branch
          %255 = sbr.rel (%p253) target = $region32
        $region31: #{tpu_custom_call.1} parent=11 // pred_region
          %s257 = ssub.s32 2048, 2048
          %258 = vsyncadd [#allocation10], %s257
          %s259 = sshll.u32 [#allocation11], 4
          %s260 = int_to_ptr.vmem [resolvable:$true] %s259
          %265 = dma.hbm_to_vmem [thread:$0]  %s6, 2048, %s260, [#allocation10], 64, 64, 4
        $region32: #{tpu_custom_call.1} parent=11 // pred_fallthru
          _
      $region12: #{tpu_custom_call.1} parent=5 // pred_fallthru
        _
      %p266 = scmp.lt.s32.totalorder %s23, 2
      // Predicated region
      $region33: #{tpu_custom_call.1} parent=5 // pred_check
        %p267 = pneg %p266
      $region34: #{tpu_custom_call.1} parent=5 // pred_check_branch
        %269 = sbr.rel (%p267) target = $region36
      $region35: #{tpu_custom_call.1} parent=5 // pred_region
        // Predicated region
        $region37: #{tpu_custom_call.1} parent=35 // pred_check
          %p270 = pneg %p43
        $region38: #{tpu_custom_call.1} parent=35 // pred_check_branch
          %272 = sbr.rel (%p270) target = $region40
        $region39: #{tpu_custom_call.1} parent=35 // pred_region
          %s273 = sand.u32 %s33, 1
          %s274 = scalar_lea.sflag [#allocation4], %s273
          %s275 = sand.u32 %s33, 1
          %s276 = smul.addr %s275, 16
          %s277 = scalar_lea.vmem [#allocation3], %s276
          %s278 = smul.u32 4, %s23
          %s280 = ssub.s32 256, 256
          %281 = vsyncadd %s274, %s280
          %s282 = smul.addr %s278, 64
          %s283 = scalar_lea.hbm %s0, %s282
          %s284 = sshll.u32 %s277, 4
          %s285 = int_to_ptr.vmem [resolvable:$true] %s284
          %290 = dma.hbm_to_vmem [thread:$0]  %s283, 256, %s285, %s274, 64, 64, 4
        $region40: #{tpu_custom_call.1} parent=35 // pred_fallthru
          _
        // Predicated region
        $region41: #{tpu_custom_call.1} parent=35 // pred_check
          %p291 = pneg %p69
        $region42: #{tpu_custom_call.1} parent=35 // pred_check_branch
          %293 = sbr.rel (%p291) target = $region44
        $region43: #{tpu_custom_call.1} parent=35 // pred_region
          %s294 = sand.u32 %s23, 1
          %s295 = scalar_lea.sflag [#allocation7], %s294
          %s296 = sand.u32 %s59, 1
          %s297 = smul.addr %s296, 64
          %s298 = scalar_lea.vmem [#allocation6], %s297
          %s300 = ssub.s32 1024, 1024
          %301 = vsyncadd %s295, %s300
          %s302 = smul.addr %s23, 16
          %s303 = smul.addr %s302, 64
          %s304 = scalar_lea.hbm %s1, %s303
          %s305 = sshll.u32 %s298, 4
          %s306 = int_to_ptr.vmem [resolvable:$true] %s305
          %311 = dma.hbm_to_vmem [thread:$0]  %s304, 1024, %s306, %s295, 64, 64, 4
        $region44: #{tpu_custom_call.1} parent=35 // pred_fallthru
          _
      $region36: #{tpu_custom_call.1} parent=5 // pred_fallthru
        _
      %p312 = scmp.le.s32.totalorder 1, %s23
      %p313 = scmp.lt.s32.totalorder %s23, 3
      %p314 = pnand %p312, %p313
      %p315 = pneg %p314
      // Predicated region
      $region45: #{tpu_custom_call.1} parent=5 // pred_check
        _
      $region46: #{tpu_custom_call.1} parent=5 // pred_check_branch
        %317 = sbr.rel (%p314) target = $region48
      $region47: #{tpu_custom_call.1} parent=5 // pred_region
        %s318 = ssub.s32 %s23, 1
        %s319 = sand.u32 %s36, 1
        %s320 = scalar_lea.sflag [#allocation4], %s319
        %s321 = sand.u32 %s36, 1
        %s322 = smul.addr %s321, 16
        %s323 = scalar_lea.vmem [#allocation3], %s322
        // Predicated region
        $region49: #{tpu_custom_call.1} parent=47 // pred_check
          %p324 = pneg %p49
        $region50: #{tpu_custom_call.1} parent=47 // pred_check_branch
          %326 = sbr.rel (%p324) target = $region52
        $region51: #{tpu_custom_call.1} parent=47 // pred_region
          %327 = dma.done %s320, 256
        $region52: #{tpu_custom_call.1} parent=47 // pred_fallthru
          _
        %s328 = sand.u32 %s28, 1
        %s329 = scalar_lea.sflag [#allocation7], %s328
        %s330 = sand.u32 %s62, 1
        %s331 = smul.addr %s330, 64
        %s332 = scalar_lea.vmem [#allocation6], %s331
        // Predicated region
        $region53: #{tpu_custom_call.1} parent=47 // pred_check
          %p333 = pneg %p75
        $region54: #{tpu_custom_call.1} parent=47 // pred_check_branch
          %335 = sbr.rel (%p333) target = $region56
        $region55: #{tpu_custom_call.1} parent=47 // pred_region
          %336 = dma.done %s329, 1024
        $region56: #{tpu_custom_call.1} parent=47 // pred_fallthru
          _
        // Predicated region
        $region57: #{tpu_custom_call.1} parent=47 // pred_check
          %p337 = pneg %p96
        $region58: #{tpu_custom_call.1} parent=47 // pred_check_branch
          %339 = sbr.rel (%p337) target = $region60
        $region59: #{tpu_custom_call.1} parent=47 // pred_region
          %340 = dma.done [#allocation7], 3072
        $region60: #{tpu_custom_call.1} parent=47 // pred_fallthru
          _
        // Predicated region
        $region61: #{tpu_custom_call.1} parent=47 // pred_check
          %p341 = pneg %p117
        $region62: #{tpu_custom_call.1} parent=47 // pred_check_branch
          %343 = sbr.rel (%p341) target = $region64
        $region63: #{tpu_custom_call.1} parent=47 // pred_region
          %344 = dma.done [#allocation10], 3072
        $region64: #{tpu_custom_call.1} parent=47 // pred_fallthru
          _
        // Predicated region
        $region65: #{tpu_custom_call.1} parent=47 // pred_check
          %p345 = pneg %p180
        $region66: #{tpu_custom_call.1} parent=47 // pred_check_branch
          %347 = sbr.rel (%p345) target = $region68
        $region67: #{tpu_custom_call.1} parent=47 // pred_region
          %348 = dma.done [#allocation10], 2048
        $region68: #{tpu_custom_call.1} parent=47 // pred_fallthru
          _
        %s349 = sand.u32 %s36, 1
        %s350 = scalar_lea.sflag [#allocation4], %s349
        %s351 = sand.u32 %s36, 1
        %s352 = smul.addr %s351, 16
        %s353 = scalar_lea.vmem [#allocation3], %s352
        %p354 = pneg %p49
        %p355 = pneg %p46
        %s356 = sand.u32 %s28, 1
        %s357 = scalar_lea.sflag [#allocation7], %s356
        %s358 = sand.u32 %s62, 1
        %s359 = smul.addr %s358, 64
        %s360 = scalar_lea.vmem [#allocation6], %s359
        %p361 = pneg %p75
        %p362 = pneg %p72
        %p363 = pneg %p96
        %p364 = pneg %p93
        %p365 = pneg %p117
        %p366 = pneg %p114
        %p367 = pneg %p138
        %p368 = pneg %p135
        %p369 = pneg %p159
        %p370 = pneg %p156
        %p371 = pneg %p180
        %p372 = pneg %p177
        %p373 = pneg %p206
        %p374 = pneg %p203
        %s375 = sand.u32 %s193, 1
        %s376 = scalar_lea.sflag [#allocation5], %s375
        %s377 = sand.u32 %s193, 1
        %s378 = smul.addr %s377, 32
        %s379 = scalar_lea.vmem [#allocation12], %s378
        %s380 = smul.u32 4, %s28
        %s381 = smul.u32 4, %s28
        %v383 = vld [vmem:[%s332] sm:$0xf]
        %v384 = vld [vmem:[%s332 + $0x4] sm:$0xf]
        %v385 = vld [vmem:[%s332 + $0x8] sm:$0xf]
        %v386 = vld [vmem:[%s332 + $0xc] sm:$0xf]
        %v387 = vld [vmem:[%s332 + $0x10] sm:$0xf]
        %v388 = vld [vmem:[%s332 + $0x14] sm:$0xf]
        %v389 = vld [vmem:[%s332 + $0x18] sm:$0xf]
        %v390 = vld [vmem:[%s332 + $0x1c] sm:$0xf]
        %v391 = vld [vmem:[%s332 + $0x20] sm:$0xf]
        %v392 = vld [vmem:[%s332 + $0x24] sm:$0xf]
        %v393 = vld [vmem:[%s332 + $0x28] sm:$0xf]
        %v394 = vld [vmem:[%s332 + $0x2c] sm:$0xf]
        %v395 = vld [vmem:[%s332 + $0x30] sm:$0xf]
        %v396 = vld [vmem:[%s332 + $0x34] sm:$0xf]
        %v397 = vld [vmem:[%s332 + $0x38] sm:$0xf]
        %v398 = vld [vmem:[%s332 + $0x3c] sm:$0xf]
        %v399 = vld [vmem:[#allocation8] sm:$0xff]
        %v400 = vld [vmem:[#allocation8 + $0x8] sm:$0xf]
        %v401 = vld [vmem:[#allocation8 + $0xc] sm:$0xff]
        %v402 = vld [vmem:[#allocation8 + $0x14] sm:$0xf]
        %v403 = vld [vmem:[#allocation8 + $0x18] sm:$0xff]
        %v404 = vld [vmem:[#allocation8 + $0x20] sm:$0xf]
        %v405 = vld [vmem:[#allocation8 + $0x24] sm:$0xff]
        %v406 = vld [vmem:[#allocation8 + $0x2c] sm:$0xf]
        %v407 = vld [vmem:[#allocation8 + $0x30] sm:$0xff]
        %v408 = vld [vmem:[#allocation8 + $0x38] sm:$0xf]
        %v409 = vld [vmem:[#allocation8 + $0x3c] sm:$0xff]
        %v410 = vld [vmem:[#allocation8 + $0x44] sm:$0xf]
        %v411 = vld [vmem:[#allocation8 + $0x48] sm:$0xff]
        %v412 = vld [vmem:[#allocation8 + $0x50] sm:$0xf]
        %v413 = vld [vmem:[#allocation8 + $0x54] sm:$0xff]
        %v414 = vld [vmem:[#allocation8 + $0x5c] sm:$0xf]
        %v415 = vld [vmem:[#allocation8 + $0x60] sm:$0xff]
        %v416 = vld [vmem:[#allocation8 + $0x68] sm:$0xf]
        %v417 = vld [vmem:[#allocation8 + $0x6c] sm:$0xff]
        %v418 = vld [vmem:[#allocation8 + $0x74] sm:$0xf]
        %v419 = vld [vmem:[#allocation8 + $0x78] sm:$0xff]
        %v420 = vld [vmem:[#allocation8 + $0x80] sm:$0xf]
        %v421 = vld [vmem:[#allocation8 + $0x84] sm:$0xff]
        %v422 = vld [vmem:[#allocation8 + $0x8c] sm:$0xf]
        %v423 = vld [vmem:[#allocation8 + $0x90] sm:$0xff]
        %v424 = vld [vmem:[#allocation8 + $0x98] sm:$0xf]
        %v425 = vld [vmem:[#allocation8 + $0x9c] sm:$0xff]
        %v426 = vld [vmem:[#allocation8 + $0xa4] sm:$0xf]
        %v427 = vld [vmem:[#allocation8 + $0xa8] sm:$0xff]
        %v428 = vld [vmem:[#allocation8 + $0xb0] sm:$0xf]
        %v429 = vld [vmem:[#allocation8 + $0xb4] sm:$0xff]
        %v430 = vld [vmem:[#allocation8 + $0xbc] sm:$0xf]
        %v431 = vld [vmem:[%s4] sm:$0x7]
        %v433 = vlaneseq
        %v434 = vshrl.u32 %v433, 7
        %v435 = vsub.s32 0, %v434
        %v436 = vrot.slane %v431, %v435
        %v437 = vlaneseq
        %v438 = vshrl.u32 %v437, 7
        %v439 = vsub.s32 1, %v438
        %v440 = vrot.slane %v431, %v439
        %v441 = vlaneseq
        %v442 = vshrl.u32 %v441, 7
        %v443 = vsub.s32 2, %v442
        %v444 = vrot.slane %v431, %v443
        %v464 = vunpack.c.l.b16 %v383
        %v465 = vunpack.c.l.b16 %v384
        %v466 = vunpack.c.l.b16 %v385
        %v467 = vunpack.c.l.b16 %v386
        %v468 = vunpack.c.l.b16 %v387
        %v469 = vunpack.c.l.b16 %v388
        %v470 = vunpack.c.l.b16 %v389
        %v471 = vunpack.c.l.b16 %v390
        %v472 = vunpack.c.l.b16 %v391
        %v473 = vunpack.c.l.b16 %v392
        %v474 = vunpack.c.l.b16 %v393
        %v475 = vunpack.c.l.b16 %v394
        %v476 = vunpack.c.l.b16 %v395
        %v477 = vunpack.c.l.b16 %v396
        %v478 = vunpack.c.l.b16 %v397
        %v479 = vunpack.c.l.b16 %v398
        %v480 = vpack.c.b16 %v465, %v464
        %v481 = vpack.c.b16 %v467, %v466
        %v482 = vpack.c.b16 %v469, %v468
        %v483 = vpack.c.b16 %v471, %v470
        %v484 = vpack.c.b16 %v473, %v472
        %v485 = vpack.c.b16 %v475, %v474
        %v486 = vpack.c.b16 %v477, %v476
        %v487 = vpack.c.b16 %v479, %v478
        %v528 = vunpack.c.l.b16 %v399
        %v529 = vunpack.c.h.b16 %v399
        %v530 = vunpack.c.l.b16 %v400
        %v531 = vunpack.c.l.b16 %v401
        %v532 = vunpack.c.h.b16 %v401
        %v533 = vunpack.c.l.b16 %v402
        %v534 = vunpack.c.l.b16 %v403
        %v535 = vunpack.c.h.b16 %v403
        %v536 = vunpack.c.l.b16 %v404
        %v537 = vunpack.c.l.b16 %v405
        %v538 = vunpack.c.h.b16 %v405
        %v539 = vunpack.c.l.b16 %v406
        %v540 = vunpack.c.l.b16 %v407
        %v541 = vunpack.c.h.b16 %v407
        %v542 = vunpack.c.l.b16 %v408
        %v543 = vunpack.c.l.b16 %v409
        %v544 = vunpack.c.h.b16 %v409
        %v545 = vunpack.c.l.b16 %v410
        %v546 = vunpack.c.l.b16 %v411
        %v547 = vunpack.c.h.b16 %v411
        %v548 = vunpack.c.l.b16 %v412
        %v549 = vunpack.c.l.b16 %v413
        %v550 = vunpack.c.h.b16 %v413
        %v551 = vunpack.c.l.b16 %v414
        %v552 = vunpack.c.l.b16 %v415
        %v553 = vunpack.c.h.b16 %v415
        %v554 = vunpack.c.l.b16 %v416
        %v555 = vunpack.c.l.b16 %v417
        %v556 = vunpack.c.h.b16 %v417
        %v557 = vunpack.c.l.b16 %v418
        %v558 = vunpack.c.l.b16 %v419
        %v559 = vunpack.c.h.b16 %v419
        %v560 = vunpack.c.l.b16 %v420
        %v561 = vunpack.c.l.b16 %v421
        %v562 = vunpack.c.h.b16 %v421
        %v563 = vunpack.c.l.b16 %v422
        %v564 = vunpack.c.l.b16 %v423
        %v565 = vunpack.c.h.b16 %v423
        %v566 = vunpack.c.l.b16 %v424
        %v567 = vunpack.c.l.b16 %v425
        %v568 = vunpack.c.h.b16 %v425
        %v569 = vunpack.c.l.b16 %v426
        %v570 = vunpack.c.l.b16 %v427
        %v571 = vunpack.c.h.b16 %v427
        %v572 = vunpack.c.l.b16 %v428
        %v573 = vunpack.c.l.b16 %v429
        %v574 = vunpack.c.h.b16 %v429
        %v575 = vunpack.c.l.b16 %v430
        %v576 = vpack.c.b16 %v531, %v528
        %v577 = vpack.c.b16 %v532, %v529
        %v578 = vpack.c.b16 %v533, %v530
        %v579 = vpack.c.b16 %v537, %v534
        %v580 = vpack.c.b16 %v538, %v535
        %v581 = vpack.c.b16 %v539, %v536
        %v582 = vpack.c.b16 %v543, %v540
        %v583 = vpack.c.b16 %v544, %v541
        %v584 = vpack.c.b16 %v545, %v542
        %v585 = vpack.c.b16 %v549, %v546
        %v586 = vpack.c.b16 %v550, %v547
        %v587 = vpack.c.b16 %v551, %v548
        %v588 = vpack.c.b16 %v555, %v552
        %v589 = vpack.c.b16 %v556, %v553
        %v590 = vpack.c.b16 %v557, %v554
        %v591 = vpack.c.b16 %v561, %v558
        %v592 = vpack.c.b16 %v562, %v559
        %v593 = vpack.c.b16 %v563, %v560
        %v594 = vpack.c.b16 %v567, %v564
        %v595 = vpack.c.b16 %v568, %v565
        %v596 = vpack.c.b16 %v569, %v566
        %v597 = vpack.c.b16 %v573, %v570
        %v598 = vpack.c.b16 %v574, %v571
        %v599 = vpack.c.b16 %v575, %v572
        %624 = vmatprep.subr.bf16.mxu0 %v598
        %625 = vmatpush1.bf16.msra.mxu0 %v597
        %626 = vmatprep.subr.bf16.mxu0 %v595
        %627 = vmatpush1.bf16.msra.mxu0 %v594
        %628 = vmatprep.subr.bf16.mxu0 %v592
        %629 = vmatpush1.bf16.msra.mxu0 %v591
        %630 = vmatprep.subr.bf16.mxu0 %v589
        %631 = vmatpush1.bf16.msra.mxu0 %v588
        %632 = vmatprep.subr.bf16.mxu0 %v586
        %633 = vmatpush1.bf16.msra.mxu0 %v585
        %634 = vmatprep.subr.bf16.mxu0 %v583
        %635 = vmatpush1.bf16.msra.mxu0 %v582
        %636 = vmatprep.subr.bf16.mxu0 %v580
        %637 = vmatpush1.bf16.msra.mxu0 %v579
        %638 = vmatprep.subr.bf16.mxu0 %v577
        %639 = vmatpush1.bf16.msra.mxu0 %v576
        %640 = vmatprep.subr.bf16.mxu0 0
        %641 = vmatpush2.bf16.msra.mxu0 0
        %642 = vmatprep.subr.bf16.mxu0 0
        %643 = vmatpush2.bf16.msra.mxu0 0
        %644 = vmatprep.subr.bf16.mxu0 0
        %645 = vmatpush2.bf16.msra.mxu0 0
        %646 = vmatprep.subr.bf16.mxu0 0
        %647 = vmatpush2.bf16.msra.mxu0 0
        %648 = vmatprep.subr.bf16.mxu0 0
        %649 = vmatpush2.bf16.msra.mxu0 0
        %650 = vmatprep.subr.bf16.mxu0 0
        %651 = vmatpush2.bf16.msra.mxu0 0
        %652 = vmatprep.subr.bf16.mxu0 0
        %653 = vmatpush2.bf16.msra.mxu0 0
        %654 = vmatprep.subr.bf16.mxu0 0
        %655 = vmatpush2.bf16.msra.mxu0 0
        %656 = vmatprep.mubr.bf16.mxu0 0
        %657 = vmatmul.mubr.bf16.gmra.mxu0 %v480
        %v658 = vpop.f32.mrf.mxu0
        %v659 = vadd.f32 %v436, %v658
        %v660 = vpop.f32.mrf.mxu0
        %v661 = vadd.f32 %v440, %v660
        %v662 = vpop.f32.mrf.mxu0
        %v663 = vadd.f32 %v436, %v662
        %v664 = vpop.f32.mrf.mxu0
        %v665 = vadd.f32 %v440, %v664
        %666 = vmatprep.mubr.bf16.mxu0 0
        %667 = vmatmul.mubr.bf16.gmra.mxu0 %v481
        %v668 = vpop.f32.mrf.mxu0
        %v669 = vadd.f32 %v436, %v668
        %v670 = vpop.f32.mrf.mxu0
        %v671 = vadd.f32 %v440, %v670
        %v672 = vpop.f32.mrf.mxu0
        %v673 = vadd.f32 %v436, %v672
        %v674 = vpop.f32.mrf.mxu0
        %v675 = vadd.f32 %v440, %v674
        %676 = vmatprep.mubr.bf16.mxu0 0
        %677 = vmatmul.mubr.bf16.gmra.mxu0 %v482
        %v678 = vpop.f32.mrf.mxu0
        %v679 = vadd.f32 %v436, %v678
        %v680 = vpop.f32.mrf.mxu0
        %v681 = vadd.f32 %v440, %v680
        %v682 = vpop.f32.mrf.mxu0
        %v683 = vadd.f32 %v436, %v682
        %v684 = vpop.f32.mrf.mxu0
        %v685 = vadd.f32 %v440, %v684
        %686 = vmatprep.mubr.bf16.mxu0 0
        %687 = vmatmul.mubr.bf16.gmra.mxu0 %v483
        %v688 = vpop.f32.mrf.mxu0
        %v689 = vadd.f32 %v436, %v688
        %v690 = vpop.f32.mrf.mxu0
        %v691 = vadd.f32 %v440, %v690
        %v692 = vpop.f32.mrf.mxu0
        %v693 = vadd.f32 %v436, %v692
        %v694 = vpop.f32.mrf.mxu0
        %v695 = vadd.f32 %v440, %v694
        %696 = vmatprep.mubr.bf16.mxu0 0
        %697 = vmatmul.mubr.bf16.gmra.mxu0 %v484
        %v698 = vpop.f32.mrf.mxu0
        %v699 = vadd.f32 %v436, %v698
        %v700 = vpop.f32.mrf.mxu0
        %v701 = vadd.f32 %v440, %v700
        %v702 = vpop.f32.mrf.mxu0
        %v703 = vadd.f32 %v436, %v702
        %v704 = vpop.f32.mrf.mxu0
        %v705 = vadd.f32 %v440, %v704
        %706 = vmatprep.mubr.bf16.mxu0 0
        %707 = vmatmul.mubr.bf16.gmra.mxu0 %v485
        %v708 = vpop.f32.mrf.mxu0
        %v709 = vadd.f32 %v436, %v708
        %v710 = vpop.f32.mrf.mxu0
        %v711 = vadd.f32 %v440, %v710
        %v712 = vpop.f32.mrf.mxu0
        %v713 = vadd.f32 %v436, %v712
        %v714 = vpop.f32.mrf.mxu0
        %v715 = vadd.f32 %v440, %v714
        %716 = vmatprep.mubr.bf16.mxu0 0
        %717 = vmatmul.mubr.bf16.gmra.mxu0 %v486
        %v718 = vpop.f32.mrf.mxu0
        %v719 = vadd.f32 %v436, %v718
        %v720 = vpop.f32.mrf.mxu0
        %v721 = vadd.f32 %v440, %v720
        %v722 = vpop.f32.mrf.mxu0
        %v723 = vadd.f32 %v436, %v722
        %v724 = vpop.f32.mrf.mxu0
        %v725 = vadd.f32 %v440, %v724
        %726 = vmatprep.mubr.bf16.mxu0 0
        %727 = vmatmul.mubr.bf16.gmra.mxu0 %v487
        %v728 = vpop.f32.mrf.mxu0
        %v729 = vadd.f32 %v436, %v728
        %v730 = vpop.f32.mrf.mxu0
        %v731 = vadd.f32 %v440, %v730
        %v732 = vpop.f32.mrf.mxu0
        %v733 = vadd.f32 %v436, %v732
        %v734 = vpop.f32.mrf.mxu0
        %v735 = vadd.f32 %v440, %v734
        %736 = vdwg.mxu0
        %737 = vmatprep.subr.bf16.mxu0 0
        %738 = vmatpush1.bf16.msra.mxu0 %v599
        %739 = vmatprep.subr.bf16.mxu0 0
        %740 = vmatpush1.bf16.msra.mxu0 %v596
        %741 = vmatprep.subr.bf16.mxu0 0
        %742 = vmatpush1.bf16.msra.mxu0 %v593
        %743 = vmatprep.subr.bf16.mxu0 0
        %744 = vmatpush1.bf16.msra.mxu0 %v590
        %745 = vmatprep.subr.bf16.mxu0 0
        %746 = vmatpush1.bf16.msra.mxu0 %v587
        %747 = vmatprep.subr.bf16.mxu0 0
        %748 = vmatpush1.bf16.msra.mxu0 %v584
        %749 = vmatprep.subr.bf16.mxu0 0
        %750 = vmatpush1.bf16.msra.mxu0 %v581
        %751 = vmatprep.subr.bf16.mxu0 0
        %752 = vmatpush1.bf16.msra.mxu0 %v578
        %753 = vmatprep.subr.bf16.mxu0 0
        %754 = vmatpush2.bf16.msra.mxu0 0
        %755 = vmatprep.subr.bf16.mxu0 0
        %756 = vmatpush2.bf16.msra.mxu0 0
        %757 = vmatprep.subr.bf16.mxu0 0
        %758 = vmatpush2.bf16.msra.mxu0 0
        %759 = vmatprep.subr.bf16.mxu0 0
        %760 = vmatpush2.bf16.msra.mxu0 0
        %761 = vmatprep.subr.bf16.mxu0 0
        %762 = vmatpush2.bf16.msra.mxu0 0
        %763 = vmatprep.subr.bf16.mxu0 0
        %764 = vmatpush2.bf16.msra.mxu0 0
        %765 = vmatprep.subr.bf16.mxu0 0
        %766 = vmatpush2.bf16.msra.mxu0 0
        %767 = vmatprep.subr.bf16.mxu0 0
        %768 = vmatpush2.bf16.msra.mxu0 0
        %769 = vmatprep.mubr.bf16.mxu0 0
        %770 = vmatmul.mubr.bf16.gmra.mxu0 %v480
        %v771 = vpop.f32.mrf.mxu0
        %v772 = vadd.f32 %v444, %v771
        %v773 = vpop.f32.mrf.mxu0
        %v774 = vpop.f32.mrf.mxu0
        %v775 = vadd.f32 %v444, %v774
        %v776 = vpop.f32.mrf.mxu0
        %777 = vmatprep.mubr.bf16.mxu0 0
        %778 = vmatmul.mubr.bf16.gmra.mxu0 %v481
        %v779 = vpop.f32.mrf.mxu0
        %v780 = vadd.f32 %v444, %v779
        %v781 = vpop.f32.mrf.mxu0
        %v782 = vpop.f32.mrf.mxu0
        %v783 = vadd.f32 %v444, %v782
        %v784 = vpop.f32.mrf.mxu0
        %785 = vmatprep.mubr.bf16.mxu0 0
        %786 = vmatmul.mubr.bf16.gmra.mxu0 %v482
        %v787 = vpop.f32.mrf.mxu0
        %v788 = vadd.f32 %v444, %v787
        %v789 = vpop.f32.mrf.mxu0
        %v790 = vpop.f32.mrf.mxu0
        %v791 = vadd.f32 %v444, %v790
        %v792 = vpop.f32.mrf.mxu0
        %793 = vmatprep.mubr.bf16.mxu0 0
        %794 = vmatmul.mubr.bf16.gmra.mxu0 %v483
        %v795 = vpop.f32.mrf.mxu0
        %v796 = vadd.f32 %v444, %v795
        %v797 = vpop.f32.mrf.mxu0
        %v798 = vpop.f32.mrf.mxu0
        %v799 = vadd.f32 %v444, %v798
        %v800 = vpop.f32.mrf.mxu0
        %801 = vmatprep.mubr.bf16.mxu0 0
        %802 = vmatmul.mubr.bf16.gmra.mxu0 %v484
        %v803 = vpop.f32.mrf.mxu0
        %v804 = vadd.f32 %v444, %v803
        %v805 = vpop.f32.mrf.mxu0
        %v806 = vpop.f32.mrf.mxu0
        %v807 = vadd.f32 %v444, %v806
        %v808 = vpop.f32.mrf.mxu0
        %809 = vmatprep.mubr.bf16.mxu0 0
        %810 = vmatmul.mubr.bf16.gmra.mxu0 %v485
        %v811 = vpop.f32.mrf.mxu0
        %v812 = vadd.f32 %v444, %v811
        %v813 = vpop.f32.mrf.mxu0
        %v814 = vpop.f32.mrf.mxu0
        %v815 = vadd.f32 %v444, %v814
        %v816 = vpop.f32.mrf.mxu0
        %817 = vmatprep.mubr.bf16.mxu0 0
        %818 = vmatmul.mubr.bf16.gmra.mxu0 %v486
        %v819 = vpop.f32.mrf.mxu0
        %v820 = vadd.f32 %v444, %v819
        %v821 = vpop.f32.mrf.mxu0
        %v822 = vpop.f32.mrf.mxu0
        %v823 = vadd.f32 %v444, %v822
        %v824 = vpop.f32.mrf.mxu0
        %825 = vmatprep.mubr.bf16.mxu0 0
        %826 = vmatmul.mubr.bf16.gmra.mxu0 %v487
        %v827 = vpop.f32.mrf.mxu0
        %v828 = vadd.f32 %v444, %v827
        %v829 = vpop.f32.mrf.mxu0
        %v830 = vpop.f32.mrf.mxu0
        %v831 = vadd.f32 %v444, %v830
        %v832 = vpop.f32.mrf.mxu0
        %833 = vdwg.mxu0
        %834 = vst [vmem:[#allocation2] sm:$0xff] %v659
        %835 = vst [vmem:[#allocation2 + $0x8] sm:$0xff] %v661
        %836 = vst [vmem:[#allocation2 + $0x10] sm:$0xff] %v772
        %837 = vst [vmem:[#allocation2 + $0x18] sm:$0xff] %v663
        %838 = vst [vmem:[#allocation2 + $0x20] sm:$0xff] %v665
        %839 = vst [vmem:[#allocation2 + $0x28] sm:$0xff] %v775
        %840 = vst [vmem:[#allocation2 + $0x30] sm:$0xff] %v669
        %841 = vst [vmem:[#allocation2 + $0x38] sm:$0xff] %v671
        %842 = vst [vmem:[#allocation2 + $0x40] sm:$0xff] %v780
        %843 = vst [vmem:[#allocation2 + $0x48] sm:$0xff] %v673
        %844 = vst [vmem:[#allocation2 + $0x50] sm:$0xff] %v675
        %845 = vst [vmem:[#allocation2 + $0x58] sm:$0xff] %v783
        %846 = vst [vmem:[#allocation2 + $0x60] sm:$0xff] %v679
        %847 = vst [vmem:[#allocation2 + $0x68] sm:$0xff] %v681
        %848 = vst [vmem:[#allocation2 + $0x70] sm:$0xff] %v788
        %849 = vst [vmem:[#allocation2 + $0x78] sm:$0xff] %v683
        %850 = vst [vmem:[#allocation2 + $0x80] sm:$0xff] %v685
        %851 = vst [vmem:[#allocation2 + $0x88] sm:$0xff] %v791
        %852 = vst [vmem:[#allocation2 + $0x90] sm:$0xff] %v689
        %853 = vst [vmem:[#allocation2 + $0x98] sm:$0xff] %v691
        %854 = vst [vmem:[#allocation2 + $0xa0] sm:$0xff] %v796
        %855 = vst [vmem:[#allocation2 + $0xa8] sm:$0xff] %v693
        %856 = vst [vmem:[#allocation2 + $0xb0] sm:$0xff] %v695
        %857 = vst [vmem:[#allocation2 + $0xb8] sm:$0xff] %v799
        %858 = vst [vmem:[#allocation2 + $0xc0] sm:$0xff] %v699
        %859 = vst [vmem:[#allocation2 + $0xc8] sm:$0xff] %v701
        %860 = vst [vmem:[#allocation2 + $0xd0] sm:$0xff] %v804
        %861 = vst [vmem:[#allocation2 + $0xd8] sm:$0xff] %v703
        %862 = vst [vmem:[#allocation2 + $0xe0] sm:$0xff] %v705
        %863 = vst [vmem:[#allocation2 + $0xe8] sm:$0xff] %v807
        %864 = vst [vmem:[#allocation2 + $0xf0] sm:$0xff] %v709
        %865 = vst [vmem:[#allocation2 + $0xf8] sm:$0xff] %v711
        %866 = vst [vmem:[#allocation2 + $0x100] sm:$0xff] %v812
        %867 = vst [vmem:[#allocation2 + $0x108] sm:$0xff] %v713
        %868 = vst [vmem:[#allocation2 + $0x110] sm:$0xff] %v715
        %869 = vst [vmem:[#allocation2 + $0x118] sm:$0xff] %v815
        %870 = vst [vmem:[#allocation2 + $0x120] sm:$0xff] %v719
        %871 = vst [vmem:[#allocation2 + $0x128] sm:$0xff] %v721
        %872 = vst [vmem:[#allocation2 + $0x130] sm:$0xff] %v820
        %873 = vst [vmem:[#allocation2 + $0x138] sm:$0xff] %v723
        %874 = vst [vmem:[#allocation2 + $0x140] sm:$0xff] %v725
        %875 = vst [vmem:[#allocation2 + $0x148] sm:$0xff] %v823
        %876 = vst [vmem:[#allocation2 + $0x150] sm:$0xff] %v729
        %877 = vst [vmem:[#allocation2 + $0x158] sm:$0xff] %v731
        %878 = vst [vmem:[#allocation2 + $0x160] sm:$0xff] %v828
        %879 = vst [vmem:[#allocation2 + $0x168] sm:$0xff] %v733
        %880 = vst [vmem:[#allocation2 + $0x170] sm:$0xff] %v735
        %881 = vst [vmem:[#allocation2 + $0x178] sm:$0xff] %v831
        %v882 = vld [vmem:[#allocation9] sm:$0xff]
        %v883 = vld [vmem:[#allocation9 + $0x8] sm:$0xf]
        %v884 = vld [vmem:[#allocation9 + $0xc] sm:$0xff]
        %v885 = vld [vmem:[#allocation9 + $0x14] sm:$0xf]
        %v886 = vld [vmem:[#allocation9 + $0x18] sm:$0xff]
        %v887 = vld [vmem:[#allocation9 + $0x20] sm:$0xf]
        %v888 = vld [vmem:[#allocation9 + $0x24] sm:$0xff]
        %v889 = vld [vmem:[#allocation9 + $0x2c] sm:$0xf]
        %v890 = vld [vmem:[#allocation9 + $0x30] sm:$0xff]
        %v891 = vld [vmem:[#allocation9 + $0x38] sm:$0xf]
        %v892 = vld [vmem:[#allocation9 + $0x3c] sm:$0xff]
        %v893 = vld [vmem:[#allocation9 + $0x44] sm:$0xf]
        %v894 = vld [vmem:[#allocation9 + $0x48] sm:$0xff]
        %v895 = vld [vmem:[#allocation9 + $0x50] sm:$0xf]
        %v896 = vld [vmem:[#allocation9 + $0x54] sm:$0xff]
        %v897 = vld [vmem:[#allocation9 + $0x5c] sm:$0xf]
        %v898 = vld [vmem:[#allocation9 + $0x60] sm:$0xff]
        %v899 = vld [vmem:[#allocation9 + $0x68] sm:$0xf]
        %v900 = vld [vmem:[#allocation9 + $0x6c] sm:$0xff]
        %v901 = vld [vmem:[#allocation9 + $0x74] sm:$0xf]
        %v902 = vld [vmem:[#allocation9 + $0x78] sm:$0xff]
        %v903 = vld [vmem:[#allocation9 + $0x80] sm:$0xf]
        %v904 = vld [vmem:[#allocation9 + $0x84] sm:$0xff]
        %v905 = vld [vmem:[#allocation9 + $0x8c] sm:$0xf]
        %v906 = vld [vmem:[#allocation9 + $0x90] sm:$0xff]
        %v907 = vld [vmem:[#allocation9 + $0x98] sm:$0xf]
        %v908 = vld [vmem:[#allocation9 + $0x9c] sm:$0xff]
        %v909 = vld [vmem:[#allocation9 + $0xa4] sm:$0xf]
        %v910 = vld [vmem:[#allocation9 + $0xa8] sm:$0xff]
        %v911 = vld [vmem:[#allocation9 + $0xb0] sm:$0xf]
        %v912 = vld [vmem:[#allocation9 + $0xb4] sm:$0xff]
        %v913 = vld [vmem:[#allocation9 + $0xbc] sm:$0xf]
        %v914 = vld [vmem:[%s5] sm:$0x1]
        %v915 = vld [vmem:[#allocation2] sm:$0xff]
        %v916 = vld [vmem:[#allocation2 + $0x8] sm:$0xff]
        %v917 = vld [vmem:[#allocation2 + $0x10] sm:$0xff]
        %v918 = vld [vmem:[#allocation2 + $0x18] sm:$0xff]
        %v919 = vld [vmem:[#allocation2 + $0x20] sm:$0xff]
        %v920 = vld [vmem:[#allocation2 + $0x28] sm:$0xff]
        %v921 = vld [vmem:[#allocation2 + $0x30] sm:$0xff]
        %v922 = vld [vmem:[#allocation2 + $0x38] sm:$0xff]
        %v923 = vld [vmem:[#allocation2 + $0x40] sm:$0xff]
        %v924 = vld [vmem:[#allocation2 + $0x48] sm:$0xff]
        %v925 = vld [vmem:[#allocation2 + $0x50] sm:$0xff]
        %v926 = vld [vmem:[#allocation2 + $0x58] sm:$0xff]
        %v959 = vunpack.c.l.b16 %v882
        %v960 = vunpack.c.h.b16 %v882
        %v961 = vunpack.c.l.b16 %v883
        %v962 = vunpack.c.l.b16 %v884
        %v963 = vunpack.c.h.b16 %v884
        %v964 = vunpack.c.l.b16 %v885
        %v965 = vunpack.c.l.b16 %v886
        %v966 = vunpack.c.h.b16 %v886
        %v967 = vunpack.c.l.b16 %v887
        %v968 = vunpack.c.l.b16 %v888
        %v969 = vunpack.c.h.b16 %v888
        %v970 = vunpack.c.l.b16 %v889
        %v971 = vunpack.c.l.b16 %v890
        %v972 = vunpack.c.h.b16 %v890
        %v973 = vunpack.c.l.b16 %v891
        %v974 = vunpack.c.l.b16 %v892
        %v975 = vunpack.c.h.b16 %v892
        %v976 = vunpack.c.l.b16 %v893
        %v977 = vunpack.c.l.b16 %v894
        %v978 = vunpack.c.h.b16 %v894
        %v979 = vunpack.c.l.b16 %v895
        %v980 = vunpack.c.l.b16 %v896
        %v981 = vunpack.c.h.b16 %v896
        %v982 = vunpack.c.l.b16 %v897
        %v983 = vunpack.c.l.b16 %v898
        %v984 = vunpack.c.h.b16 %v898
        %v985 = vunpack.c.l.b16 %v899
        %v986 = vunpack.c.l.b16 %v900
        %v987 = vunpack.c.h.b16 %v900
        %v988 = vunpack.c.l.b16 %v901
        %v989 = vunpack.c.l.b16 %v902
        %v990 = vunpack.c.h.b16 %v902
        %v991 = vunpack.c.l.b16 %v903
        %v992 = vunpack.c.l.b16 %v904
        %v993 = vunpack.c.h.b16 %v904
        %v994 = vunpack.c.l.b16 %v905
        %v995 = vunpack.c.l.b16 %v906
        %v996 = vunpack.c.h.b16 %v906
        %v997 = vunpack.c.l.b16 %v907
        %v998 = vunpack.c.l.b16 %v908
        %v999 = vunpack.c.h.b16 %v908
        %v1000 = vunpack.c.l.b16 %v909
        %v1001 = vunpack.c.l.b16 %v910
        %v1002 = vunpack.c.h.b16 %v910
        %v1003 = vunpack.c.l.b16 %v911
        %v1004 = vunpack.c.l.b16 %v912
        %v1005 = vunpack.c.h.b16 %v912
        %v1006 = vunpack.c.l.b16 %v913
        %v1007 = vpack.c.b16 %v962, %v959
        %v1008 = vpack.c.b16 %v963, %v960
        %v1009 = vpack.c.b16 %v964, %v961
        %v1010 = vpack.c.b16 %v968, %v965
        %v1011 = vpack.c.b16 %v969, %v966
        %v1012 = vpack.c.b16 %v970, %v967
        %v1013 = vpack.c.b16 %v974, %v971
        %v1014 = vpack.c.b16 %v975, %v972
        %v1015 = vpack.c.b16 %v976, %v973
        %v1016 = vpack.c.b16 %v980, %v977
        %v1017 = vpack.c.b16 %v981, %v978
        %v1018 = vpack.c.b16 %v982, %v979
        %v1019 = vpack.c.b16 %v986, %v983
        %v1020 = vpack.c.b16 %v987, %v984
        %v1021 = vpack.c.b16 %v988, %v985
        %v1022 = vpack.c.b16 %v992, %v989
        %v1023 = vpack.c.b16 %v993, %v990
        %v1024 = vpack.c.b16 %v994, %v991
        %v1025 = vpack.c.b16 %v998, %v995
        %v1026 = vpack.c.b16 %v999, %v996
        %v1027 = vpack.c.b16 %v1000, %v997
        %v1028 = vpack.c.b16 %v1004, %v1001
        %v1029 = vpack.c.b16 %v1005, %v1002
        %v1030 = vpack.c.b16 %v1006, %v1003
        %1055 = vmatprep.subr.bf16.mxu0 %v1029
        %1056 = vmatpush1.bf16.msra.mxu0 %v1028
        %1057 = vmatprep.subr.bf16.mxu0 %v1026
        %1058 = vmatpush1.bf16.msra.mxu0 %v1025
        %1059 = vmatprep.subr.bf16.mxu0 %v1023
        %1060 = vmatpush1.bf16.msra.mxu0 %v1022
        %1061 = vmatprep.subr.bf16.mxu0 %v1020
        %1062 = vmatpush1.bf16.msra.mxu0 %v1019
        %1063 = vmatprep.subr.bf16.mxu0 %v1017
        %1064 = vmatpush1.bf16.msra.mxu0 %v1016
        %1065 = vmatprep.subr.bf16.mxu0 %v1014
        %1066 = vmatpush1.bf16.msra.mxu0 %v1013
        %1067 = vmatprep.subr.bf16.mxu0 %v1011
        %1068 = vmatpush1.bf16.msra.mxu0 %v1010
        %1069 = vmatprep.subr.bf16.mxu0 %v1008
        %1070 = vmatpush1.bf16.msra.mxu0 %v1007
        %1071 = vmatprep.subr.bf16.mxu0 0
        %1072 = vmatpush2.bf16.msra.mxu0 0
        %1073 = vmatprep.subr.bf16.mxu0 0
        %1074 = vmatpush2.bf16.msra.mxu0 0
        %1075 = vmatprep.subr.bf16.mxu0 0
        %1076 = vmatpush2.bf16.msra.mxu0 0
        %1077 = vmatprep.subr.bf16.mxu0 0
        %1078 = vmatpush2.bf16.msra.mxu0 0
        %1079 = vmatprep.subr.bf16.mxu0 0
        %1080 = vmatpush2.bf16.msra.mxu0 0
        %1081 = vmatprep.subr.bf16.mxu0 0
        %1082 = vmatpush2.bf16.msra.mxu0 0
        %1083 = vmatprep.subr.bf16.mxu0 0
        %1084 = vmatpush2.bf16.msra.mxu0 0
        %1085 = vmatprep.subr.bf16.mxu0 0
        %1086 = vmatpush2.bf16.msra.mxu0 0
        %1087 = vmatprep.mubr.bf16.mxu0 0
        %1088 = vmatmul.mubr.bf16.gmra.mxu0 0
        %v1089 = vpop.f32.mrf.mxu0
        %v1090 = vadd.f32 0.0, %v1089
        %v1091 = vpop.f32.mrf.mxu0
        %v1092 = vadd.f32 0.0, %v1091
        %v1093 = vpop.f32.mrf.mxu0
        %v1094 = vadd.f32 0.0, %v1093
        %v1095 = vpop.f32.mrf.mxu0
        %v1096 = vadd.f32 0.0, %v1095
        %1097 = vmatprep.mubr.bf16.mxu0 0
        %1098 = vmatmul.mubr.bf16.gmra.mxu0 0
        %v1099 = vpop.f32.mrf.mxu0
        %v1100 = vadd.f32 0.0, %v1099
        %v1101 = vpop.f32.mrf.mxu0
        %v1102 = vadd.f32 0.0, %v1101
        %v1103 = vpop.f32.mrf.mxu0
        %v1104 = vadd.f32 0.0, %v1103
        %v1105 = vpop.f32.mrf.mxu0
        %v1106 = vadd.f32 0.0, %v1105
        %1107 = vdwg.mxu0
        %1108 = vmatprep.subr.bf16.mxu0 0
        %1109 = vmatpush1.bf16.msra.mxu0 %v1030
        %1110 = vmatprep.subr.bf16.mxu0 0
        %1111 = vmatpush1.bf16.msra.mxu0 %v1027
        %1112 = vmatprep.subr.bf16.mxu0 0
        %1113 = vmatpush1.bf16.msra.mxu0 %v1024
        %1114 = vmatprep.subr.bf16.mxu0 0
        %1115 = vmatpush1.bf16.msra.mxu0 %v1021
        %1116 = vmatprep.subr.bf16.mxu0 0
        %1117 = vmatpush1.bf16.msra.mxu0 %v1018
        %1118 = vmatprep.subr.bf16.mxu0 0
        %1119 = vmatpush1.bf16.msra.mxu0 %v1015
        %1120 = vmatprep.subr.bf16.mxu0 0
        %1121 = vmatpush1.bf16.msra.mxu0 %v1012
        %1122 = vmatprep.subr.bf16.mxu0 0
        %1123 = vmatpush1.bf16.msra.mxu0 %v1009
        %1124 = vmatprep.subr.bf16.mxu0 0
        %1125 = vmatpush2.bf16.msra.mxu0 0
        %1126 = vmatprep.subr.bf16.mxu0 0
        %1127 = vmatpush2.bf16.msra.mxu0 0
        %1128 = vmatprep.subr.bf16.mxu0 0
        %1129 = vmatpush2.bf16.msra.mxu0 0
        %1130 = vmatprep.subr.bf16.mxu0 0
        %1131 = vmatpush2.bf16.msra.mxu0 0
        %1132 = vmatprep.subr.bf16.mxu0 0
        %1133 = vmatpush2.bf16.msra.mxu0 0
        %1134 = vmatprep.subr.bf16.mxu0 0
        %1135 = vmatpush2.bf16.msra.mxu0 0
        %1136 = vmatprep.subr.bf16.mxu0 0
        %1137 = vmatpush2.bf16.msra.mxu0 0
        %1138 = vmatprep.subr.bf16.mxu0 0
        %1139 = vmatpush2.bf16.msra.mxu0 0
        %1140 = vmatprep.mubr.bf16.mxu0 0
        %1141 = vmatmul.mubr.bf16.gmra.mxu0 0
        %v1142 = vpop.f32.mrf.mxu0
        %v1143 = vadd.f32 0.0, %v1142
        %v1144 = vpop.f32.mrf.mxu0
        %v1145 = vpop.f32.mrf.mxu0
        %v1146 = vadd.f32 0.0, %v1145
        %v1147 = vpop.f32.mrf.mxu0
        %1148 = vmatprep.mubr.bf16.mxu0 0
        %1149 = vmatmul.mubr.bf16.gmra.mxu0 0
        %v1150 = vpop.f32.mrf.mxu0
        %v1151 = vadd.f32 0.0, %v1150
        %v1152 = vpop.f32.mrf.mxu0
        %v1153 = vpop.f32.mrf.mxu0
        %v1154 = vadd.f32 0.0, %v1153
        %v1155 = vpop.f32.mrf.mxu0
        %1156 = vdwg.mxu0
        %v1157 = vadd.f32 %v915, %v1090
        %v1158 = vadd.f32 %v918, %v1094
        %v1159 = vadd.f32 %v921, %v1100
        %v1160 = vadd.f32 %v924, %v1104
        %v1161 = vmul.f32 %v1157, 0.5
        %v1162 = vmul.f32 %v1158, 0.5
        %v1163 = vmul.f32 %v1159, 0.5
        %v1164 = vmul.f32 %v1160, 0.5
        %v1165 = vtanh.pop %v1161
        %v1166 = vtanh.pop %v1162
        %v1167 = vtanh.pop %v1163
        %v1168 = vtanh.pop %v1164
        %v1169 = vadd.f32 %v1165, 1.0
        %v1170 = vadd.f32 %v1166, 1.0
        %v1171 = vadd.f32 %v1167, 1.0
        %v1172 = vadd.f32 %v1168, 1.0
        %v1173 = vmul.f32 %v1169, 0.5
        %v1174 = vmul.f32 %v1170, 0.5
        %v1175 = vmul.f32 %v1171, 0.5
        %v1176 = vmul.f32 %v1172, 0.5
        %v1177 = vadd.f32 %v916, %v1092
        %v1178 = vadd.f32 %v919, %v1096
        %v1179 = vadd.f32 %v922, %v1102
        %v1180 = vadd.f32 %v925, %v1106
        %v1181 = vmul.f32 %v1177, 0.5
        %v1182 = vmul.f32 %v1178, 0.5
        %v1183 = vmul.f32 %v1179, 0.5
        %v1184 = vmul.f32 %v1180, 0.5
        %v1185 = vtanh.pop %v1181
        %v1186 = vtanh.pop %v1182
        %v1187 = vtanh.pop %v1183
        %v1188 = vtanh.pop %v1184
        %v1189 = vadd.f32 %v1185, 1.0
        %v1190 = vadd.f32 %v1186, 1.0
        %v1191 = vadd.f32 %v1187, 1.0
        %v1192 = vadd.f32 %v1188, 1.0
        %v1193 = vmul.f32 %v1189, 0.5
        %v1194 = vmul.f32 %v1190, 0.5
        %v1195 = vmul.f32 %v1191, 0.5
        %v1196 = vmul.f32 %v1192, 0.5
        %v1198 = vlaneseq
        %v1199 = vshrl.u32 %v1198, 7
        %v1200 = vsub.s32 0, %v1199
        %v1201 = vrot.slane %v914, %v1200
        %v1203 = vadd.f32 %v1143, %v1201
        %v1204 = vadd.f32 %v1146, %v1201
        %v1205 = vadd.f32 %v1151, %v1201
        %v1206 = vadd.f32 %v1154, %v1201
        %v1207 = vmul.f32 %v1173, %v1203
        %v1208 = vmul.f32 %v1174, %v1204
        %v1209 = vmul.f32 %v1175, %v1205
        %v1210 = vmul.f32 %v1176, %v1206
        %v1211 = vadd.f32 %v917, %v1207
        %v1212 = vadd.f32 %v920, %v1208
        %v1213 = vadd.f32 %v923, %v1209
        %v1214 = vadd.f32 %v926, %v1210
        %v1215 = vtanh.pop %v1211
        %v1216 = vtanh.pop %v1212
        %v1217 = vtanh.pop %v1213
        %v1218 = vtanh.pop %v1214
        %v1219 = vsub.f32 1.0, %v1193
        %v1220 = vsub.f32 1.0, %v1194
        %v1221 = vsub.f32 1.0, %v1195
        %v1222 = vsub.f32 1.0, %v1196
        %v1223 = vmul.f32 %v1219, %v1215
        %v1224 = vmul.f32 %v1220, %v1216
        %v1225 = vmul.f32 %v1221, %v1217
        %v1226 = vmul.f32 %v1222, %v1218
        %v1227 = vmul.f32 %v1193, 0.0
        %v1228 = vmul.f32 %v1194, 0.0
        %v1229 = vmul.f32 %v1195, 0.0
        %v1230 = vmul.f32 %v1196, 0.0
        %v1231 = vadd.f32 %v1223, %v1227
        %v1232 = vadd.f32 %v1224, %v1228
        %v1233 = vadd.f32 %v1225, %v1229
        %v1234 = vadd.f32 %v1226, %v1230
        %v1235 = vld [vmem:[#allocation2 + $0x60] sm:$0xff]
        %v1236 = vld [vmem:[#allocation2 + $0x68] sm:$0xff]
        %v1237 = vld [vmem:[#allocation2 + $0x70] sm:$0xff]
        %v1238 = vld [vmem:[#allocation2 + $0x78] sm:$0xff]
        %v1239 = vld [vmem:[#allocation2 + $0x80] sm:$0xff]
        %v1240 = vld [vmem:[#allocation2 + $0x88] sm:$0xff]
        %v1241 = vld [vmem:[#allocation2 + $0x90] sm:$0xff]
        %v1242 = vld [vmem:[#allocation2 + $0x98] sm:$0xff]
        %v1243 = vld [vmem:[#allocation2 + $0xa0] sm:$0xff]
        %v1244 = vld [vmem:[#allocation2 + $0xa8] sm:$0xff]
        %v1245 = vld [vmem:[#allocation2 + $0xb0] sm:$0xff]
        %v1246 = vld [vmem:[#allocation2 + $0xb8] sm:$0xff]
        %v1247 = vpack.c.bf16 %v1232, %v1231
        %v1248 = vpack.c.bf16 %v1234, %v1233
        %1249 = vmatprep.subr.bf16.mxu0 %v1029
        %1250 = vmatpush1.bf16.msra.mxu0 %v1028
        %1251 = vmatprep.subr.bf16.mxu0 %v1026
        %1252 = vmatpush1.bf16.msra.mxu0 %v1025
        %1253 = vmatprep.subr.bf16.mxu0 %v1023
        %1254 = vmatpush1.bf16.msra.mxu0 %v1022
        %1255 = vmatprep.subr.bf16.mxu0 %v1020
        %1256 = vmatpush1.bf16.msra.mxu0 %v1019
        %1257 = vmatprep.subr.bf16.mxu0 %v1017
        %1258 = vmatpush1.bf16.msra.mxu0 %v1016
        %1259 = vmatprep.subr.bf16.mxu0 %v1014
        %1260 = vmatpush1.bf16.msra.mxu0 %v1013
        %1261 = vmatprep.subr.bf16.mxu0 %v1011
        %1262 = vmatpush1.bf16.msra.mxu0 %v1010
        %1263 = vmatprep.subr.bf16.mxu0 %v1008
        %1264 = vmatpush1.bf16.msra.mxu0 %v1007
        %1265 = vmatprep.subr.bf16.mxu0 0
        %1266 = vmatpush2.bf16.msra.mxu0 0
        %1267 = vmatprep.subr.bf16.mxu0 0
        %1268 = vmatpush2.bf16.msra.mxu0 0
        %1269 = vmatprep.subr.bf16.mxu0 0
        %1270 = vmatpush2.bf16.msra.mxu0 0
        %1271 = vmatprep.subr.bf16.mxu0 0
        %1272 = vmatpush2.bf16.msra.mxu0 0
        %1273 = vmatprep.subr.bf16.mxu0 0
        %1274 = vmatpush2.bf16.msra.mxu0 0
        %1275 = vmatprep.subr.bf16.mxu0 0
        %1276 = vmatpush2.bf16.msra.mxu0 0
        %1277 = vmatprep.subr.bf16.mxu0 0
        %1278 = vmatpush2.bf16.msra.mxu0 0
        %1279 = vmatprep.subr.bf16.mxu0 0
        %1280 = vmatpush2.bf16.msra.mxu0 0
        %1281 = vmatprep.mubr.bf16.mxu0 0
        %1282 = vmatmul.mubr.bf16.gmra.mxu0 %v1247
        %v1283 = vpop.f32.mrf.mxu0
        %v1284 = vadd.f32 0.0, %v1283
        %v1285 = vpop.f32.mrf.mxu0
        %v1286 = vadd.f32 0.0, %v1285
        %v1287 = vpop.f32.mrf.mxu0
        %v1288 = vadd.f32 0.0, %v1287
        %v1289 = vpop.f32.mrf.mxu0
        %v1290 = vadd.f32 0.0, %v1289
        %1291 = vmatprep.mubr.bf16.mxu0 0
        %1292 = vmatmul.mubr.bf16.gmra.mxu0 %v1248
        %v1293 = vpop.f32.mrf.mxu0
        %v1294 = vadd.f32 0.0, %v1293
        %v1295 = vpop.f32.mrf.mxu0
        %v1296 = vadd.f32 0.0, %v1295
        %v1297 = vpop.f32.mrf.mxu0
        %v1298 = vadd.f32 0.0, %v1297
        %v1299 = vpop.f32.mrf.mxu0
        %v1300 = vadd.f32 0.0, %v1299
        %1301 = vdwg.mxu0
        %1302 = vmatprep.subr.bf16.mxu0 0
        %1303 = vmatpush1.bf16.msra.mxu0 %v1030
        %1304 = vmatprep.subr.bf16.mxu0 0
        %1305 = vmatpush1.bf16.msra.mxu0 %v1027
        %1306 = vmatprep.subr.bf16.mxu0 0
        %1307 = vmatpush1.bf16.msra.mxu0 %v1024
        %1308 = vmatprep.subr.bf16.mxu0 0
        %1309 = vmatpush1.bf16.msra.mxu0 %v1021
        %1310 = vmatprep.subr.bf16.mxu0 0
        %1311 = vmatpush1.bf16.msra.mxu0 %v1018
        %1312 = vmatprep.subr.bf16.mxu0 0
        %1313 = vmatpush1.bf16.msra.mxu0 %v1015
        %1314 = vmatprep.subr.bf16.mxu0 0
        %1315 = vmatpush1.bf16.msra.mxu0 %v1012
        %1316 = vmatprep.subr.bf16.mxu0 0
        %1317 = vmatpush1.bf16.msra.mxu0 %v1009
        %1318 = vmatprep.subr.bf16.mxu0 0
        %1319 = vmatpush2.bf16.msra.mxu0 0
        %1320 = vmatprep.subr.bf16.mxu0 0
        %1321 = vmatpush2.bf16.msra.mxu0 0
        %1322 = vmatprep.subr.bf16.mxu0 0
        %1323 = vmatpush2.bf16.msra.mxu0 0
        %1324 = vmatprep.subr.bf16.mxu0 0
        %1325 = vmatpush2.bf16.msra.mxu0 0
        %1326 = vmatprep.subr.bf16.mxu0 0
        %1327 = vmatpush2.bf16.msra.mxu0 0
        %1328 = vmatprep.subr.bf16.mxu0 0
        %1329 = vmatpush2.bf16.msra.mxu0 0
        %1330 = vmatprep.subr.bf16.mxu0 0
        %1331 = vmatpush2.bf16.msra.mxu0 0
        %1332 = vmatprep.subr.bf16.mxu0 0
        %1333 = vmatpush2.bf16.msra.mxu0 0
        %1334 = vmatprep.mubr.bf16.mxu0 0
        %1335 = vmatmul.mubr.bf16.gmra.mxu0 %v1247
        %v1336 = vpop.f32.mrf.mxu0
        %v1337 = vadd.f32 0.0, %v1336
        %v1338 = vpop.f32.mrf.mxu0
        %v1339 = vpop.f32.mrf.mxu0
        %v1340 = vadd.f32 0.0, %v1339
        %v1341 = vpop.f32.mrf.mxu0
        %1342 = vmatprep.mubr.bf16.mxu0 0
        %1343 = vmatmul.mubr.bf16.gmra.mxu0 %v1248
        %v1344 = vpop.f32.mrf.mxu0
        %v1345 = vadd.f32 0.0, %v1344
        %v1346 = vpop.f32.mrf.mxu0
        %v1347 = vpop.f32.mrf.mxu0
        %v1348 = vadd.f32 0.0, %v1347
        %v1349 = vpop.f32.mrf.mxu0
        %1350 = vdwg.mxu0
        %v1351 = vadd.f32 %v1235, %v1284
        %v1352 = vadd.f32 %v1238, %v1288
        %v1353 = vadd.f32 %v1241, %v1294
        %v1354 = vadd.f32 %v1244, %v1298
        %v1355 = vmul.f32 %v1351, 0.5
        %v1356 = vmul.f32 %v1352, 0.5
        %v1357 = vmul.f32 %v1353, 0.5
        %v1358 = vmul.f32 %v1354, 0.5
        %v1359 = vtanh.pop %v1355
        %v1360 = vtanh.pop %v1356
        %v1361 = vtanh.pop %v1357
        %v1362 = vtanh.pop %v1358
        %v1363 = vadd.f32 %v1359, 1.0
        %v1364 = vadd.f32 %v1360, 1.0
        %v1365 = vadd.f32 %v1361, 1.0
        %v1366 = vadd.f32 %v1362, 1.0
        %v1367 = vmul.f32 %v1363, 0.5
        %v1368 = vmul.f32 %v1364, 0.5
        %v1369 = vmul.f32 %v1365, 0.5
        %v1370 = vmul.f32 %v1366, 0.5
        %v1371 = vadd.f32 %v1236, %v1286
        %v1372 = vadd.f32 %v1239, %v1290
        %v1373 = vadd.f32 %v1242, %v1296
        %v1374 = vadd.f32 %v1245, %v1300
        %v1375 = vmul.f32 %v1371, 0.5
        %v1376 = vmul.f32 %v1372, 0.5
        %v1377 = vmul.f32 %v1373, 0.5
        %v1378 = vmul.f32 %v1374, 0.5
        %v1379 = vtanh.pop %v1375
        %v1380 = vtanh.pop %v1376
        %v1381 = vtanh.pop %v1377
        %v1382 = vtanh.pop %v1378
        %v1383 = vadd.f32 %v1379, 1.0
        %v1384 = vadd.f32 %v1380, 1.0
        %v1385 = vadd.f32 %v1381, 1.0
        %v1386 = vadd.f32 %v1382, 1.0
        %v1387 = vmul.f32 %v1383, 0.5
        %v1388 = vmul.f32 %v1384, 0.5
        %v1389 = vmul.f32 %v1385, 0.5
        %v1390 = vmul.f32 %v1386, 0.5
        %v1391 = vadd.f32 %v1337, %v1201
        %v1392 = vadd.f32 %v1340, %v1201
        %v1393 = vadd.f32 %v1345, %v1201
        %v1394 = vadd.f32 %v1348, %v1201
        %v1395 = vmul.f32 %v1367, %v1391
        %v1396 = vmul.f32 %v1368, %v1392
        %v1397 = vmul.f32 %v1369, %v1393
        %v1398 = vmul.f32 %v1370, %v1394
        %v1399 = vadd.f32 %v1237, %v1395
        %v1400 = vadd.f32 %v1240, %v1396
        %v1401 = vadd.f32 %v1243, %v1397
        %v1402 = vadd.f32 %v1246, %v1398
        %v1403 = vtanh.pop %v1399
        %v1404 = vtanh.pop %v1400
        %v1405 = vtanh.pop %v1401
        %v1406 = vtanh.pop %v1402
        %v1407 = vsub.f32 1.0, %v1387
        %v1408 = vsub.f32 1.0, %v1388
        %v1409 = vsub.f32 1.0, %v1389
        %v1410 = vsub.f32 1.0, %v1390
        %v1411 = vmul.f32 %v1407, %v1403
        %v1412 = vmul.f32 %v1408, %v1404
        %v1413 = vmul.f32 %v1409, %v1405
        %v1414 = vmul.f32 %v1410, %v1406
        %v1415 = vmul.f32 %v1387, %v1231
        %v1416 = vmul.f32 %v1388, %v1232
        %v1417 = vmul.f32 %v1389, %v1233
        %v1418 = vmul.f32 %v1390, %v1234
        %v1419 = vadd.f32 %v1411, %v1415
        %v1420 = vadd.f32 %v1412, %v1416
        %v1421 = vadd.f32 %v1413, %v1417
        %v1422 = vadd.f32 %v1414, %v1418
        %v1423 = vld [vmem:[#allocation2 + $0xc0] sm:$0xff]
        %v1424 = vld [vmem:[#allocation2 + $0xc8] sm:$0xff]
        %v1425 = vld [vmem:[#allocation2 + $0xd0] sm:$0xff]
        %v1426 = vld [vmem:[#allocation2 + $0xd8] sm:$0xff]
        %v1427 = vld [vmem:[#allocation2 + $0xe0] sm:$0xff]
        %v1428 = vld [vmem:[#allocation2 + $0xe8] sm:$0xff]
        %v1429 = vld [vmem:[#allocation2 + $0xf0] sm:$0xff]
        %v1430 = vld [vmem:[#allocation2 + $0xf8] sm:$0xff]
        %v1431 = vld [vmem:[#allocation2 + $0x100] sm:$0xff]
        %v1432 = vld [vmem:[#allocation2 + $0x108] sm:$0xff]
        %v1433 = vld [vmem:[#allocation2 + $0x110] sm:$0xff]
        %v1434 = vld [vmem:[#allocation2 + $0x118] sm:$0xff]
        %v1435 = vpack.c.bf16 %v1420, %v1419
        %v1436 = vpack.c.bf16 %v1422, %v1421
        %1437 = vmatprep.subr.bf16.mxu0 %v1029
        %1438 = vmatpush1.bf16.msra.mxu0 %v1028
        %1439 = vmatprep.subr.bf16.mxu0 %v1026
        %1440 = vmatpush1.bf16.msra.mxu0 %v1025
        %1441 = vmatprep.subr.bf16.mxu0 %v1023
        %1442 = vmatpush1.bf16.msra.mxu0 %v1022
        %1443 = vmatprep.subr.bf16.mxu0 %v1020
        %1444 = vmatpush1.bf16.msra.mxu0 %v1019
        %1445 = vmatprep.subr.bf16.mxu0 %v1017
        %1446 = vmatpush1.bf16.msra.mxu0 %v1016
        %1447 = vmatprep.subr.bf16.mxu0 %v1014
        %1448 = vmatpush1.bf16.msra.mxu0 %v1013
        %1449 = vmatprep.subr.bf16.mxu0 %v1011
        %1450 = vmatpush1.bf16.msra.mxu0 %v1010
        %1451 = vmatprep.subr.bf16.mxu0 %v1008
        %1452 = vmatpush1.bf16.msra.mxu0 %v1007
        %1453 = vmatprep.subr.bf16.mxu0 0
        %1454 = vmatpush2.bf16.msra.mxu0 0
        %1455 = vmatprep.subr.bf16.mxu0 0
        %1456 = vmatpush2.bf16.msra.mxu0 0
        %1457 = vmatprep.subr.bf16.mxu0 0
        %1458 = vmatpush2.bf16.msra.mxu0 0
        %1459 = vmatprep.subr.bf16.mxu0 0
        %1460 = vmatpush2.bf16.msra.mxu0 0
        %1461 = vmatprep.subr.bf16.mxu0 0
        %1462 = vmatpush2.bf16.msra.mxu0 0
        %1463 = vmatprep.subr.bf16.mxu0 0
        %1464 = vmatpush2.bf16.msra.mxu0 0
        %1465 = vmatprep.subr.bf16.mxu0 0
        %1466 = vmatpush2.bf16.msra.mxu0 0
        %1467 = vmatprep.subr.bf16.mxu0 0
        %1468 = vmatpush2.bf16.msra.mxu0 0
        %1469 = vmatprep.mubr.bf16.mxu0 0
        %1470 = vmatmul.mubr.bf16.gmra.mxu0 %v1435
        %v1471 = vpop.f32.mrf.mxu0
        %v1472 = vadd.f32 0.0, %v1471
        %v1473 = vpop.f32.mrf.mxu0
        %v1474 = vadd.f32 0.0, %v1473
        %v1475 = vpop.f32.mrf.mxu0
        %v1476 = vadd.f32 0.0, %v1475
        %v1477 = vpop.f32.mrf.mxu0
        %v1478 = vadd.f32 0.0, %v1477
        %1479 = vmatprep.mubr.bf16.mxu0 0
        %1480 = vmatmul.mubr.bf16.gmra.mxu0 %v1436
        %v1481 = vpop.f32.mrf.mxu0
        %v1482 = vadd.f32 0.0, %v1481
        %v1483 = vpop.f32.mrf.mxu0
        %v1484 = vadd.f32 0.0, %v1483
        %v1485 = vpop.f32.mrf.mxu0
        %v1486 = vadd.f32 0.0, %v1485
        %v1487 = vpop.f32.mrf.mxu0
        %v1488 = vadd.f32 0.0, %v1487
        %1489 = vdwg.mxu0
        %1490 = vmatprep.subr.bf16.mxu0 0
        %1491 = vmatpush1.bf16.msra.mxu0 %v1030
        %1492 = vmatprep.subr.bf16.mxu0 0
        %1493 = vmatpush1.bf16.msra.mxu0 %v1027
        %1494 = vmatprep.subr.bf16.mxu0 0
        %1495 = vmatpush1.bf16.msra.mxu0 %v1024
        %1496 = vmatprep.subr.bf16.mxu0 0
        %1497 = vmatpush1.bf16.msra.mxu0 %v1021
        %1498 = vmatprep.subr.bf16.mxu0 0
        %1499 = vmatpush1.bf16.msra.mxu0 %v1018
        %1500 = vmatprep.subr.bf16.mxu0 0
        %1501 = vmatpush1.bf16.msra.mxu0 %v1015
        %1502 = vmatprep.subr.bf16.mxu0 0
        %1503 = vmatpush1.bf16.msra.mxu0 %v1012
        %1504 = vmatprep.subr.bf16.mxu0 0
        %1505 = vmatpush1.bf16.msra.mxu0 %v1009
        %1506 = vmatprep.subr.bf16.mxu0 0
        %1507 = vmatpush2.bf16.msra.mxu0 0
        %1508 = vmatprep.subr.bf16.mxu0 0
        %1509 = vmatpush2.bf16.msra.mxu0 0
        %1510 = vmatprep.subr.bf16.mxu0 0
        %1511 = vmatpush2.bf16.msra.mxu0 0
        %1512 = vmatprep.subr.bf16.mxu0 0
        %1513 = vmatpush2.bf16.msra.mxu0 0
        %1514 = vmatprep.subr.bf16.mxu0 0
        %1515 = vmatpush2.bf16.msra.mxu0 0
        %1516 = vmatprep.subr.bf16.mxu0 0
        %1517 = vmatpush2.bf16.msra.mxu0 0
        %1518 = vmatprep.subr.bf16.mxu0 0
        %1519 = vmatpush2.bf16.msra.mxu0 0
        %1520 = vmatprep.subr.bf16.mxu0 0
        %1521 = vmatpush2.bf16.msra.mxu0 0
        %1522 = vmatprep.mubr.bf16.mxu0 0
        %1523 = vmatmul.mubr.bf16.gmra.mxu0 %v1435
        %v1524 = vpop.f32.mrf.mxu0
        %v1525 = vadd.f32 0.0, %v1524
        %v1526 = vpop.f32.mrf.mxu0
        %v1527 = vpop.f32.mrf.mxu0
        %v1528 = vadd.f32 0.0, %v1527
        %v1529 = vpop.f32.mrf.mxu0
        %1530 = vmatprep.mubr.bf16.mxu0 0
        %1531 = vmatmul.mubr.bf16.gmra.mxu0 %v1436
        %v1532 = vpop.f32.mrf.mxu0
        %v1533 = vadd.f32 0.0, %v1532
        %v1534 = vpop.f32.mrf.mxu0
        %v1535 = vpop.f32.mrf.mxu0
        %v1536 = vadd.f32 0.0, %v1535
        %v1537 = vpop.f32.mrf.mxu0
        %1538 = vdwg.mxu0
        %v1539 = vadd.f32 %v1423, %v1472
        %v1540 = vadd.f32 %v1426, %v1476
        %v1541 = vadd.f32 %v1429, %v1482
        %v1542 = vadd.f32 %v1432, %v1486
        %v1543 = vmul.f32 %v1539, 0.5
        %v1544 = vmul.f32 %v1540, 0.5
        %v1545 = vmul.f32 %v1541, 0.5
        %v1546 = vmul.f32 %v1542, 0.5
        %v1547 = vtanh.pop %v1543
        %v1548 = vtanh.pop %v1544
        %v1549 = vtanh.pop %v1545
        %v1550 = vtanh.pop %v1546
        %v1551 = vadd.f32 %v1547, 1.0
        %v1552 = vadd.f32 %v1548, 1.0
        %v1553 = vadd.f32 %v1549, 1.0
        %v1554 = vadd.f32 %v1550, 1.0
        %v1555 = vmul.f32 %v1551, 0.5
        %v1556 = vmul.f32 %v1552, 0.5
        %v1557 = vmul.f32 %v1553, 0.5
        %v1558 = vmul.f32 %v1554, 0.5
        %v1559 = vadd.f32 %v1424, %v1474
        %v1560 = vadd.f32 %v1427, %v1478
        %v1561 = vadd.f32 %v1430, %v1484
        %v1562 = vadd.f32 %v1433, %v1488
        %v1563 = vmul.f32 %v1559, 0.5
        %v1564 = vmul.f32 %v1560, 0.5
        %v1565 = vmul.f32 %v1561, 0.5
        %v1566 = vmul.f32 %v1562, 0.5
        %v1567 = vtanh.pop %v1563
        %v1568 = vtanh.pop %v1564
        %v1569 = vtanh.pop %v1565
        %v1570 = vtanh.pop %v1566
        %v1571 = vadd.f32 %v1567, 1.0
        %v1572 = vadd.f32 %v1568, 1.0
        %v1573 = vadd.f32 %v1569, 1.0
        %v1574 = vadd.f32 %v1570, 1.0
        %v1575 = vmul.f32 %v1571, 0.5
        %v1576 = vmul.f32 %v1572, 0.5
        %v1577 = vmul.f32 %v1573, 0.5
        %v1578 = vmul.f32 %v1574, 0.5
        %v1579 = vadd.f32 %v1525, %v1201
        %v1580 = vadd.f32 %v1528, %v1201
        %v1581 = vadd.f32 %v1533, %v1201
        %v1582 = vadd.f32 %v1536, %v1201
        %v1583 = vmul.f32 %v1555, %v1579
        %v1584 = vmul.f32 %v1556, %v1580
        %v1585 = vmul.f32 %v1557, %v1581
        %v1586 = vmul.f32 %v1558, %v1582
        %v1587 = vadd.f32 %v1425, %v1583
        %v1588 = vadd.f32 %v1428, %v1584
        %v1589 = vadd.f32 %v1431, %v1585
        %v1590 = vadd.f32 %v1434, %v1586
        %v1591 = vtanh.pop %v1587
        %v1592 = vtanh.pop %v1588
        %v1593 = vtanh.pop %v1589
        %v1594 = vtanh.pop %v1590
        %v1595 = vsub.f32 1.0, %v1575
        %v1596 = vsub.f32 1.0, %v1576
        %v1597 = vsub.f32 1.0, %v1577
        %v1598 = vsub.f32 1.0, %v1578
        %v1599 = vmul.f32 %v1595, %v1591
        %v1600 = vmul.f32 %v1596, %v1592
        %v1601 = vmul.f32 %v1597, %v1593
        %v1602 = vmul.f32 %v1598, %v1594
        %v1603 = vmul.f32 %v1575, %v1419
        %v1604 = vmul.f32 %v1576, %v1420
        %v1605 = vmul.f32 %v1577, %v1421
        %v1606 = vmul.f32 %v1578, %v1422
        %v1607 = vadd.f32 %v1599, %v1603
        %v1608 = vadd.f32 %v1600, %v1604
        %v1609 = vadd.f32 %v1601, %v1605
        %v1610 = vadd.f32 %v1602, %v1606
        %v1611 = vld [vmem:[#allocation2 + $0x120] sm:$0xff]
        %v1612 = vld [vmem:[#allocation2 + $0x128] sm:$0xff]
        %v1613 = vld [vmem:[#allocation2 + $0x130] sm:$0xff]
        %v1614 = vld [vmem:[#allocation2 + $0x138] sm:$0xff]
        %v1615 = vld [vmem:[#allocation2 + $0x140] sm:$0xff]
        %v1616 = vld [vmem:[#allocation2 + $0x148] sm:$0xff]
        %v1617 = vld [vmem:[#allocation2 + $0x150] sm:$0xff]
        %v1618 = vld [vmem:[#allocation2 + $0x158] sm:$0xff]
        %v1619 = vld [vmem:[#allocation2 + $0x160] sm:$0xff]
        %v1620 = vld [vmem:[#allocation2 + $0x168] sm:$0xff]
        %v1621 = vld [vmem:[#allocation2 + $0x170] sm:$0xff]
        %v1622 = vld [vmem:[#allocation2 + $0x178] sm:$0xff]
        %v1623 = vpack.c.bf16 %v1608, %v1607
        %v1624 = vpack.c.bf16 %v1610, %v1609
        %1625 = vmatprep.subr.bf16.mxu0 %v1029
        %1626 = vmatpush1.bf16.msra.mxu0 %v1028
        %1627 = vmatprep.subr.bf16.mxu0 %v1026
        %1628 = vmatpush1.bf16.msra.mxu0 %v1025
        %1629 = vmatprep.subr.bf16.mxu0 %v1023
        %1630 = vmatpush1.bf16.msra.mxu0 %v1022
        %1631 = vmatprep.subr.bf16.mxu0 %v1020
        %1632 = vmatpush1.bf16.msra.mxu0 %v1019
        %1633 = vmatprep.subr.bf16.mxu0 %v1017
        %1634 = vmatpush1.bf16.msra.mxu0 %v1016
        %1635 = vmatprep.subr.bf16.mxu0 %v1014
        %1636 = vmatpush1.bf16.msra.mxu0 %v1013
        %1637 = vmatprep.subr.bf16.mxu0 %v1011
        %1638 = vmatpush1.bf16.msra.mxu0 %v1010
        %1639 = vmatprep.subr.bf16.mxu0 %v1008
        %1640 = vmatpush1.bf16.msra.mxu0 %v1007
        %1641 = vmatprep.subr.bf16.mxu0 0
        %1642 = vmatpush2.bf16.msra.mxu0 0
        %1643 = vmatprep.subr.bf16.mxu0 0
        %1644 = vmatpush2.bf16.msra.mxu0 0
        %1645 = vmatprep.subr.bf16.mxu0 0
        %1646 = vmatpush2.bf16.msra.mxu0 0
        %1647 = vmatprep.subr.bf16.mxu0 0
        %1648 = vmatpush2.bf16.msra.mxu0 0
        %1649 = vmatprep.subr.bf16.mxu0 0
        %1650 = vmatpush2.bf16.msra.mxu0 0
        %1651 = vmatprep.subr.bf16.mxu0 0
        %1652 = vmatpush2.bf16.msra.mxu0 0
        %1653 = vmatprep.subr.bf16.mxu0 0
        %1654 = vmatpush2.bf16.msra.mxu0 0
        %1655 = vmatprep.subr.bf16.mxu0 0
        %1656 = vmatpush2.bf16.msra.mxu0 0
        %1657 = vmatprep.mubr.bf16.mxu0 0
        %1658 = vmatmul.mubr.bf16.gmra.mxu0 %v1623
        %v1659 = vpop.f32.mrf.mxu0
        %v1660 = vadd.f32 0.0, %v1659
        %v1661 = vpop.f32.mrf.mxu0
        %v1662 = vadd.f32 0.0, %v1661
        %v1663 = vpop.f32.mrf.mxu0
        %v1664 = vadd.f32 0.0, %v1663
        %v1665 = vpop.f32.mrf.mxu0
        %v1666 = vadd.f32 0.0, %v1665
        %1667 = vmatprep.mubr.bf16.mxu0 0
        %1668 = vmatmul.mubr.bf16.gmra.mxu0 %v1624
        %v1669 = vpop.f32.mrf.mxu0
        %v1670 = vadd.f32 0.0, %v1669
        %v1671 = vpop.f32.mrf.mxu0
        %v1672 = vadd.f32 0.0, %v1671
        %v1673 = vpop.f32.mrf.mxu0
        %v1674 = vadd.f32 0.0, %v1673
        %v1675 = vpop.f32.mrf.mxu0
        %v1676 = vadd.f32 0.0, %v1675
        %1677 = vdwg.mxu0
        %1678 = vmatprep.subr.bf16.mxu0 0
        %1679 = vmatpush1.bf16.msra.mxu0 %v1030
        %1680 = vmatprep.subr.bf16.mxu0 0
        %1681 = vmatpush1.bf16.msra.mxu0 %v1027
        %1682 = vmatprep.subr.bf16.mxu0 0
        %1683 = vmatpush1.bf16.msra.mxu0 %v1024
        %1684 = vmatprep.subr.bf16.mxu0 0
        %1685 = vmatpush1.bf16.msra.mxu0 %v1021
        %1686 = vmatprep.subr.bf16.mxu0 0
        %1687 = vmatpush1.bf16.msra.mxu0 %v1018
        %1688 = vmatprep.subr.bf16.mxu0 0
        %1689 = vmatpush1.bf16.msra.mxu0 %v1015
        %1690 = vmatprep.subr.bf16.mxu0 0
        %1691 = vmatpush1.bf16.msra.mxu0 %v1012
        %1692 = vmatprep.subr.bf16.mxu0 0
        %1693 = vmatpush1.bf16.msra.mxu0 %v1009
        %1694 = vmatprep.subr.bf16.mxu0 0
        %1695 = vmatpush2.bf16.msra.mxu0 0
        %1696 = vmatprep.subr.bf16.mxu0 0
        %1697 = vmatpush2.bf16.msra.mxu0 0
        %1698 = vmatprep.subr.bf16.mxu0 0
        %1699 = vmatpush2.bf16.msra.mxu0 0
        %1700 = vmatprep.subr.bf16.mxu0 0
        %1701 = vmatpush2.bf16.msra.mxu0 0
        %1702 = vmatprep.subr.bf16.mxu0 0
        %1703 = vmatpush2.bf16.msra.mxu0 0
        %1704 = vmatprep.subr.bf16.mxu0 0
        %1705 = vmatpush2.bf16.msra.mxu0 0
        %1706 = vmatprep.subr.bf16.mxu0 0
        %1707 = vmatpush2.bf16.msra.mxu0 0
        %1708 = vmatprep.subr.bf16.mxu0 0
        %1709 = vmatpush2.bf16.msra.mxu0 0
        %1710 = vmatprep.mubr.bf16.mxu0 0
        %1711 = vmatmul.mubr.bf16.gmra.mxu0 %v1623
        %v1712 = vpop.f32.mrf.mxu0
        %v1713 = vadd.f32 0.0, %v1712
        %v1714 = vpop.f32.mrf.mxu0
        %v1715 = vpop.f32.mrf.mxu0
        %v1716 = vadd.f32 0.0, %v1715
        %v1717 = vpop.f32.mrf.mxu0
        %1718 = vmatprep.mubr.bf16.mxu0 0
        %1719 = vmatmul.mubr.bf16.gmra.mxu0 %v1624
        %v1720 = vpop.f32.mrf.mxu0
        %v1721 = vadd.f32 0.0, %v1720
        %v1722 = vpop.f32.mrf.mxu0
        %v1723 = vpop.f32.mrf.mxu0
        %v1724 = vadd.f32 0.0, %v1723
        %v1725 = vpop.f32.mrf.mxu0
        %1726 = vdwg.mxu0
        %v1727 = vadd.f32 %v1611, %v1660
        %v1728 = vadd.f32 %v1614, %v1664
        %v1729 = vadd.f32 %v1617, %v1670
        %v1730 = vadd.f32 %v1620, %v1674
        %v1731 = vmul.f32 %v1727, 0.5
        %v1732 = vmul.f32 %v1728, 0.5
        %v1733 = vmul.f32 %v1729, 0.5
        %v1734 = vmul.f32 %v1730, 0.5
        %v1735 = vtanh.pop %v1731
        %v1736 = vtanh.pop %v1732
        %v1737 = vtanh.pop %v1733
        %v1738 = vtanh.pop %v1734
        %v1739 = vadd.f32 %v1735, 1.0
        %v1740 = vadd.f32 %v1736, 1.0
        %v1741 = vadd.f32 %v1737, 1.0
        %v1742 = vadd.f32 %v1738, 1.0
        %v1743 = vmul.f32 %v1739, 0.5
        %v1744 = vmul.f32 %v1740, 0.5
        %v1745 = vmul.f32 %v1741, 0.5
        %v1746 = vmul.f32 %v1742, 0.5
        %v1747 = vadd.f32 %v1612, %v1662
        %v1748 = vadd.f32 %v1615, %v1666
        %v1749 = vadd.f32 %v1618, %v1672
        %v1750 = vadd.f32 %v1621, %v1676
        %v1751 = vmul.f32 %v1747, 0.5
        %v1752 = vmul.f32 %v1748, 0.5
        %v1753 = vmul.f32 %v1749, 0.5
        %v1754 = vmul.f32 %v1750, 0.5
        %v1755 = vtanh.pop %v1751
        %v1756 = vtanh.pop %v1752
        %v1757 = vtanh.pop %v1753
        %v1758 = vtanh.pop %v1754
        %v1759 = vadd.f32 %v1755, 1.0
        %v1760 = vadd.f32 %v1756, 1.0
        %v1761 = vadd.f32 %v1757, 1.0
        %v1762 = vadd.f32 %v1758, 1.0
        %v1763 = vmul.f32 %v1759, 0.5
        %v1764 = vmul.f32 %v1760, 0.5
        %v1765 = vmul.f32 %v1761, 0.5
        %v1766 = vmul.f32 %v1762, 0.5
        %v1767 = vadd.f32 %v1713, %v1201
        %v1768 = vadd.f32 %v1716, %v1201
        %v1769 = vadd.f32 %v1721, %v1201
        %v1770 = vadd.f32 %v1724, %v1201
        %v1771 = vmul.f32 %v1743, %v1767
        %v1772 = vmul.f32 %v1744, %v1768
        %v1773 = vmul.f32 %v1745, %v1769
        %v1774 = vmul.f32 %v1746, %v1770
        %v1775 = vadd.f32 %v1613, %v1771
        %v1776 = vadd.f32 %v1616, %v1772
        %v1777 = vadd.f32 %v1619, %v1773
        %v1778 = vadd.f32 %v1622, %v1774
        %v1779 = vtanh.pop %v1775
        %v1780 = vtanh.pop %v1776
        %v1781 = vtanh.pop %v1777
        %v1782 = vtanh.pop %v1778
        %v1783 = vsub.f32 1.0, %v1763
        %v1784 = vsub.f32 1.0, %v1764
        %v1785 = vsub.f32 1.0, %v1765
        %v1786 = vsub.f32 1.0, %v1766
        %v1787 = vmul.f32 %v1783, %v1779
        %v1788 = vmul.f32 %v1784, %v1780
        %v1789 = vmul.f32 %v1785, %v1781
        %v1790 = vmul.f32 %v1786, %v1782
        %v1791 = vmul.f32 %v1763, %v1607
        %v1792 = vmul.f32 %v1764, %v1608
        %v1793 = vmul.f32 %v1765, %v1609
        %v1794 = vmul.f32 %v1766, %v1610
        %v1795 = vadd.f32 %v1787, %v1791
        %v1796 = vadd.f32 %v1788, %v1792
        %v1797 = vadd.f32 %v1789, %v1793
        %v1798 = vadd.f32 %v1790, %v1794
        %v1799 = vld [vmem:[%s323] sm:$0xf]
        %v1800 = vld [vmem:[%s323 + $0x4] sm:$0xf]
        %v1801 = vld [vmem:[%s323 + $0x8] sm:$0xf]
        %v1802 = vld [vmem:[%s323 + $0xc] sm:$0xf]
        %v1803 = vpack.c.bf16 %v1796, %v1795
        %v1804 = vpack.c.bf16 %v1798, %v1797
        %v1809 = vunpack.c.l.b16 %v1799
        %v1810 = vunpack.c.l.b16 %v1800
        %v1811 = vunpack.c.l.b16 %v1801
        %v1812 = vunpack.c.l.b16 %v1802
        %v1813 = vpack.c.b16 %v1810, %v1809
        %v1814 = vpack.c.b16 %v1812, %v1811
        %v1817 = vld [vmem:[#allocation11] sm:$0xf]
        %v1818 = vld [vmem:[#allocation11 + $0x4] sm:$0xf]
        %v1819 = vld [vmem:[#allocation11 + $0x8] sm:$0xf]
        %v1820 = vld [vmem:[#allocation11 + $0xc] sm:$0xf]
        %v1821 = vld [vmem:[#allocation11 + $0x10] sm:$0xf]
        %v1822 = vld [vmem:[#allocation11 + $0x14] sm:$0xf]
        %v1823 = vld [vmem:[#allocation11 + $0x18] sm:$0xf]
        %v1824 = vld [vmem:[#allocation11 + $0x1c] sm:$0xf]
        %v1825 = vld [vmem:[#allocation11 + $0x20] sm:$0xf]
        %v1826 = vld [vmem:[#allocation11 + $0x24] sm:$0xf]
        %v1827 = vld [vmem:[#allocation11 + $0x28] sm:$0xf]
        %v1828 = vld [vmem:[#allocation11 + $0x2c] sm:$0xf]
        %v1829 = vld [vmem:[#allocation11 + $0x30] sm:$0xf]
        %v1830 = vld [vmem:[#allocation11 + $0x34] sm:$0xf]
        %v1831 = vld [vmem:[#allocation11 + $0x38] sm:$0xf]
        %v1832 = vld [vmem:[#allocation11 + $0x3c] sm:$0xf]
        %v1833 = vld [vmem:[#allocation11 + $0x40] sm:$0xf]
        %v1834 = vld [vmem:[#allocation11 + $0x44] sm:$0xf]
        %v1835 = vld [vmem:[#allocation11 + $0x48] sm:$0xf]
        %v1836 = vld [vmem:[#allocation11 + $0x4c] sm:$0xf]
        %v1837 = vld [vmem:[#allocation11 + $0x50] sm:$0xf]
        %v1838 = vld [vmem:[#allocation11 + $0x54] sm:$0xf]
        %v1839 = vld [vmem:[#allocation11 + $0x58] sm:$0xf]
        %v1840 = vld [vmem:[#allocation11 + $0x5c] sm:$0xf]
        %v1841 = vld [vmem:[#allocation11 + $0x60] sm:$0xf]
        %v1842 = vld [vmem:[#allocation11 + $0x64] sm:$0xf]
        %v1843 = vld [vmem:[#allocation11 + $0x68] sm:$0xf]
        %v1844 = vld [vmem:[#allocation11 + $0x6c] sm:$0xf]
        %v1845 = vld [vmem:[#allocation11 + $0x70] sm:$0xf]
        %v1846 = vld [vmem:[#allocation11 + $0x74] sm:$0xf]
        %v1847 = vld [vmem:[#allocation11 + $0x78] sm:$0xf]
        %v1848 = vld [vmem:[#allocation11 + $0x7c] sm:$0xf]
        %v1881 = vunpack.c.l.b16 %v1817
        %v1882 = vunpack.c.l.b16 %v1818
        %v1883 = vunpack.c.l.b16 %v1819
        %v1884 = vunpack.c.l.b16 %v1820
        %v1885 = vunpack.c.l.b16 %v1821
        %v1886 = vunpack.c.l.b16 %v1822
        %v1887 = vunpack.c.l.b16 %v1823
        %v1888 = vunpack.c.l.b16 %v1824
        %v1889 = vunpack.c.l.b16 %v1825
        %v1890 = vunpack.c.l.b16 %v1826
        %v1891 = vunpack.c.l.b16 %v1827
        %v1892 = vunpack.c.l.b16 %v1828
        %v1893 = vunpack.c.l.b16 %v1829
        %v1894 = vunpack.c.l.b16 %v1830
        %v1895 = vunpack.c.l.b16 %v1831
        %v1896 = vunpack.c.l.b16 %v1832
        %v1897 = vunpack.c.l.b16 %v1833
        %v1898 = vunpack.c.l.b16 %v1834
        %v1899 = vunpack.c.l.b16 %v1835
        %v1900 = vunpack.c.l.b16 %v1836
        %v1901 = vunpack.c.l.b16 %v1837
        %v1902 = vunpack.c.l.b16 %v1838
        %v1903 = vunpack.c.l.b16 %v1839
        %v1904 = vunpack.c.l.b16 %v1840
        %v1905 = vunpack.c.l.b16 %v1841
        %v1906 = vunpack.c.l.b16 %v1842
        %v1907 = vunpack.c.l.b16 %v1843
        %v1908 = vunpack.c.l.b16 %v1844
        %v1909 = vunpack.c.l.b16 %v1845
        %v1910 = vunpack.c.l.b16 %v1846
        %v1911 = vunpack.c.l.b16 %v1847
        %v1912 = vunpack.c.l.b16 %v1848
        %v1913 = vpack.c.b16 %v1882, %v1881
        %v1914 = vpack.c.b16 %v1884, %v1883
        %v1915 = vpack.c.b16 %v1886, %v1885
        %v1916 = vpack.c.b16 %v1888, %v1887
        %v1917 = vpack.c.b16 %v1890, %v1889
        %v1918 = vpack.c.b16 %v1892, %v1891
        %v1919 = vpack.c.b16 %v1894, %v1893
        %v1920 = vpack.c.b16 %v1896, %v1895
        %v1921 = vpack.c.b16 %v1898, %v1897
        %v1922 = vpack.c.b16 %v1900, %v1899
        %v1923 = vpack.c.b16 %v1902, %v1901
        %v1924 = vpack.c.b16 %v1904, %v1903
        %v1925 = vpack.c.b16 %v1906, %v1905
        %v1926 = vpack.c.b16 %v1908, %v1907
        %v1927 = vpack.c.b16 %v1910, %v1909
        %v1928 = vpack.c.b16 %v1912, %v1911
        %1945 = vmatprep.subr.bf16.mxu0 0
        %1946 = vmatpush1.bf16.msra.mxu0 %v1920
        %1947 = vmatprep.subr.bf16.mxu0 0
        %1948 = vmatpush1.bf16.msra.mxu0 %v1919
        %1949 = vmatprep.subr.bf16.mxu0 0
        %1950 = vmatpush1.bf16.msra.mxu0 %v1918
        %1951 = vmatprep.subr.bf16.mxu0 0
        %1952 = vmatpush1.bf16.msra.mxu0 %v1917
        %1953 = vmatprep.subr.bf16.mxu0 0
        %1954 = vmatpush1.bf16.msra.mxu0 %v1916
        %1955 = vmatprep.subr.bf16.mxu0 0
        %1956 = vmatpush1.bf16.msra.mxu0 %v1915
        %1957 = vmatprep.subr.bf16.mxu0 0
        %1958 = vmatpush1.bf16.msra.mxu0 %v1914
        %1959 = vmatprep.subr.bf16.mxu0 0
        %1960 = vmatpush1.bf16.msra.mxu0 %v1913
        %1961 = vmatprep.subr.bf16.mxu0 0
        %1962 = vmatpush2.bf16.msra.mxu0 %v1928
        %1963 = vmatprep.subr.bf16.mxu0 0
        %1964 = vmatpush2.bf16.msra.mxu0 %v1927
        %1965 = vmatprep.subr.bf16.mxu0 0
        %1966 = vmatpush2.bf16.msra.mxu0 %v1926
        %1967 = vmatprep.subr.bf16.mxu0 0
        %1968 = vmatpush2.bf16.msra.mxu0 %v1925
        %1969 = vmatprep.subr.bf16.mxu0 0
        %1970 = vmatpush2.bf16.msra.mxu0 %v1924
        %1971 = vmatprep.subr.bf16.mxu0 0
        %1972 = vmatpush2.bf16.msra.mxu0 %v1923
        %1973 = vmatprep.subr.bf16.mxu0 0
        %1974 = vmatpush2.bf16.msra.mxu0 %v1922
        %1975 = vmatprep.subr.bf16.mxu0 0
        %1976 = vmatpush2.bf16.msra.mxu0 %v1921
        %1977 = vmatprep.mubr.bf16.mxu0 %v1803
        %1978 = vmatmul.mubr.bf16.gmra.mxu0 %v1813
        %v1979 = vpop.f32.mrf.mxu0
        %v1980 = vadd.f32 0.0, %v1979
        %v1981 = vpop.f32.mrf.mxu0
        %v1982 = vpop.f32.mrf.mxu0
        %v1983 = vadd.f32 0.0, %v1982
        %v1984 = vpop.f32.mrf.mxu0
        %1985 = vmatprep.mubr.bf16.mxu0 %v1804
        %1986 = vmatmul.mubr.bf16.gmra.mxu0 %v1814
        %v1987 = vpop.f32.mrf.mxu0
        %v1988 = vadd.f32 0.0, %v1987
        %v1989 = vpop.f32.mrf.mxu0
        %v1990 = vpop.f32.mrf.mxu0
        %v1991 = vadd.f32 0.0, %v1990
        %v1992 = vpop.f32.mrf.mxu0
        %1993 = vdwg.mxu0
        %1994 = vst [vmem:[%s379] sm:$0xff] %v1980
        %1995 = vst [vmem:[%s379 + $0x8] sm:$0xff] %v1983
        %1996 = vst [vmem:[%s379 + $0x10] sm:$0xff] %v1988
        %1997 = vst [vmem:[%s379 + $0x18] sm:$0xff] %v1991
        %s1998 = sand.u32 %s193, 1
        %s1999 = scalar_lea.sflag [#allocation5], %s1998
        %s2000 = sand.u32 %s193, 1
        %s2001 = smul.addr %s2000, 32
        %s2002 = scalar_lea.vmem [#allocation12], %s2001
        // Predicated region
        $region69: #{tpu_custom_call.1} parent=47 // pred_check
          %p2003 = pneg %p203
        $region70: #{tpu_custom_call.1} parent=47 // pred_check_branch
          %2005 = sbr.rel (%p2003) target = $region72
        $region71: #{tpu_custom_call.1} parent=47 // pred_region
          %s2006 = smul.u32 4, %s28
          %s2008 = ssub.s32 512, 512
          %2009 = vsyncadd %s1999, %s2008
          %s2010 = smul.addr %s2006, 128
          %s2011 = scalar_lea.hbm %s7, %s2010
          %s2012 = sshll.u32 %s2002, 4
          %s2013 = int_to_ptr.vmem [resolvable:$true] %s2012
          %2018 = dma.vmem_to_hbm [thread:$0]  %s2013, 512, %s2011, %s1999, 128, 128, 8
        $region72: #{tpu_custom_call.1} parent=47 // pred_fallthru
          _
      $region48: #{tpu_custom_call.1} parent=5 // pred_fallthru
        _
      %p2019 = scmp.le.s32.totalorder 2, %s23
      // Predicated region
      $region73: #{tpu_custom_call.1} parent=5 // pred_check
        %p2020 = pneg %p2019
      $region74: #{tpu_custom_call.1} parent=5 // pred_check_branch
        %2022 = sbr.rel (%p2020) target = $region76
      $region75: #{tpu_custom_call.1} parent=5 // pred_region
        %s2023 = ssub.s32 %s23, 2
        // Predicated region
        $region77: #{tpu_custom_call.1} parent=75 // pred_check
          %p2024 = pneg %p209
        $region78: #{tpu_custom_call.1} parent=75 // pred_check_branch
          %2026 = sbr.rel (%p2024) target = $region80
        $region79: #{tpu_custom_call.1} parent=75 // pred_region
          %s2027 = sand.u32 %s194, 1
          %s2028 = scalar_lea.sflag [#allocation5], %s2027
          %s2029 = sand.u32 %s194, 1
          %s2030 = smul.addr %s2029, 32
          %s2031 = scalar_lea.vmem [#allocation12], %s2030
          %2032 = dma.done %s2028, 512
        $region80: #{tpu_custom_call.1} parent=75 // pred_fallthru
          _
      $region76: #{tpu_custom_call.1} parent=5 // pred_fallthru
        _
    $region6: #{tpu_custom_call.1} parent=1 // loop_footer
      %s27 = sadd.s32 1, %s23
    $region7: #{tpu_custom_call.1} parent=1 // loop_footer_branch
      %22 = sbr.rel target = $region3
    $region8: #{tpu_custom_call.1} parent=1 // loop_exit
      _
    %2033 = vsyncpa [#allocation4], 1
    %s2034 = scalar_lea.sflag [#allocation4], 1
    %2035 = vsyncpa %s2034, 1
    %2036 = vsyncpa [#allocation7], 1
    %s2037 = scalar_lea.sflag [#allocation7], 1
    %2038 = vsyncpa %s2037, 1
    %2039 = vsyncpa [#allocation10], 1
    %2040 = vsyncpa [#allocation5], 1
    %s2041 = scalar_lea.sflag [#allocation5], 1
    %2042 = vsyncpa %s2041, 1

</llo_original>
